<compile_context>
chip_gen: v6e
topology: v6e:2x2x1
jax: 0.10.0
libtpu: 0.0.40
codegen_flags: <defaults>
</compile_context>

<pallas_src>
import functools

import jax
import jax.numpy as jnp
from jax import lax
from jax.experimental import pallas as pl
from jax.experimental.pallas import tpu as pltpu


def _round_up(v, m):
    return (v + m - 1) // m * m


def _batch_block(n, max_nb=8):
    # Largest divisor of n that is <= max_nb (images fused per grid step).
    for nb in range(min(n, max_nb), 0, -1):
        if n % nb == 0:
            return nb
    return 1


def _residual_block_kernel(xf_ref, xr_ref, w1_ref, b1_ref, w2_ref, b2_ref,
                           o_ref, *, H, W, NB, SA, MG, CT, mxu_dtype):
    # xf_ref : (1, Cp, LT)   NB flattened zero-padded images, image i's padded
    #                        flat (Hp*Wp, row-major) starts at lane MG + i*SA
    # xr_ref : (NB, Cp, SA)  pre-anchored residual (x at anchor h*Wp + w)
    # w*_ref : (Cp, 9*Cp)    column = (ky*3 + kx)*Cp + cin
    # b*_ref : (Cp, 1)
    # o_ref  : (NB, Cp, SA)  anchored output; wrapper drops lane/channel pad
    Wp = W + 2
    A = H * Wp
    shifts = [ky * Wp + kx for ky in range(3) for kx in range(3)]

    xf = xf_ref[0]                                   # (Cp, LT)

    # In-kernel validity mask over conv1's extended column space. Index math in
    # f32 (div + floor is exact for these magnitudes) — no DMA'd mask input.
    col = lax.broadcasted_iota(jnp.int32, (1, CT), 1).astype(jnp.float32)
    j = col - MG                                     # anchored position
    jj = jnp.maximum(j, 0.0)
    r = jj - jnp.floor(jj / SA) * SA                 # within-image offset
    wc = r - jnp.floor(r / Wp) * Wp                  # within-row column
    valid = (j >= 0.0) & (j < NB * SA) & (r < A) & (wc < W)
    mask = valid.astype(jnp.float32)

    def taps(src, start, width):
        # (Cp, *) -> (9*Cp, width); rows tap-major then channel. Cp is padded
        # to 8, so each tap block is a full sublane group -> aligned concat.
        return jnp.concatenate(
            [src[:, start + s:start + s + width] for s in shifts], axis=0
        ).astype(mxu_dtype)

    # ---- conv1 + bias + ReLU (masked: padding / gap / margin columns -> 0) --
    y = jnp.dot(w1_ref[...], taps(xf, 0, CT),
                preferred_element_type=jnp.float32)
    y = jnp.maximum(y + b1_ref[...], 0.0) * mask     # (Cp, CT)

    # ---- conv2: taps read masked y directly at delta = s - (Wp+1) around the
    # anchor base MG (no yf re-embedding / extra relayout buffer) -------------
    z = jnp.dot(w2_ref[...], taps(y, MG - (Wp + 1), NB * SA),
                preferred_element_type=jnp.float32)
    z = z + b2_ref[...]                              # (Cp, NB*SA)

    # ---- residual add + ReLU; per-image slices start at i*SA (multiple of
    # 128) so every store is a full-width unmasked vst ------------------------
    for i in range(NB):
        o_ref[i] = jnp.maximum(z[:, i * SA:(i + 1) * SA] + xr_ref[i],
                               0.0).astype(o_ref.dtype)


def residual_block_forward(x, w1, b1, w2, b2, *, use_bf16=False):
    """x: (N, C, H, W) f32; w*: (Cout, Cin, 3, 3) PyTorch OIHW; b*: (Cout,)."""
    N, C, H, W = x.shape
    Hp, Wp = H + 2, W + 2
    Lp = Hp * Wp
    A = H * Wp

    Cp = _round_up(max(C, 8), 8)            # sublane-aligned channel count
    SA = _round_up(max(Lp + 2, A), 128)     # per-image lane stride (aligned)
    NB = _batch_block(N)                    # images fused per grid step
    Ngrid = N // NB
    MG = 128                                # front margin (>= Wp+1, aligned)
    CT = MG + NB * SA + 128                 # conv1 / mask column space
    LT = CT + 128                           # flattened input lanes per block

    mxu_dtype = jnp.bfloat16 if use_bf16 else jnp.float32

    # OIHW -> (Cp, 9*Cp), column = (ky*3 + kx)*Cp + cin, zero-padded channels.
    def w_mat(w):
        wt = jnp.transpose(w, (0, 2, 3, 1))                       # (O,ky,kx,I)
        wt = jnp.pad(wt, ((0, Cp - C), (0, 0), (0, 0), (0, Cp - C)))
        return wt.reshape(Cp, 9 * Cp).astype(mxu_dtype)

    w1m, w2m = w_mat(w1), w_mat(w2)
    b1c = jnp.pad(b1, (0, Cp - C)).reshape(Cp, 1).astype(jnp.float32)
    b2c = jnp.pad(b2, (0, Cp - C)).reshape(Cp, 1).astype(jnp.float32)

    # Flattened zero-padded images, NB per block folded into the lane axis at
    # stride SA, with 128-lane front margin (conv2 halo) and back margin.
    xp = jnp.pad(x, ((0, 0), (0, Cp - C), (1, 1), (1, 1))).astype(jnp.float32)
    xpf = jnp.pad(xp.reshape(N, Cp, Lp), ((0, 0), (0, 0), (0, SA - Lp)))
    xpf = (xpf.reshape(Ngrid, NB, Cp, SA).transpose(0, 2, 1, 3)
              .reshape(Ngrid, Cp, NB * SA))
    xf = jnp.pad(xpf, ((0, 0), (0, 0), (MG, LT - MG - NB * SA)))

    # Pre-anchored residual: x[n, c, h, w] at anchor column h*Wp + w.
    xa = jnp.pad(x, ((0, 0), (0, Cp - C), (0, 0), (0, Wp - W))).astype(jnp.float32)
    xr = jnp.pad(xa.reshape(N, Cp, A), ((0, 0), (0, 0), (0, SA - A)))

    kernel = functools.partial(_residual_block_kernel, H=H, W=W, NB=NB, SA=SA,
                               MG=MG, CT=CT, mxu_dtype=mxu_dtype)
    out = pl.pallas_call(
        kernel,
        out_shape=jax.ShapeDtypeStruct((N, Cp, SA), jnp.float32),
        grid=(Ngrid,),
        in_specs=[
            pl.BlockSpec((1, Cp, LT), lambda g: (g, 0, 0)),
            pl.BlockSpec((NB, Cp, SA), lambda g: (g, 0, 0)),
            pl.BlockSpec((Cp, 9 * Cp), lambda g: (0, 0)),
            pl.BlockSpec((Cp, 1), lambda g: (0, 0)),
            pl.BlockSpec((Cp, 9 * Cp), lambda g: (0, 0)),
            pl.BlockSpec((Cp, 1), lambda g: (0, 0)),
        ],
        out_specs=pl.BlockSpec((NB, Cp, SA), lambda g: (g, 0, 0)),
        compiler_params=pltpu.CompilerParams(
            dimension_semantics=("parallel",)),
    )(xf, xr, w1m, b1c, w2m, b2c)

    # Drop channel / lane padding, recover (N, C, H, W).
    return out[:, :C, :A].reshape(N, C, H, Wp)[:, :, :, :W].astype(x.dtype)


def _reference(x, w1, b1, w2, b2):
    dn = ('NCHW', 'OIHW', 'NCHW')
    y = lax.conv_general_dilated(x, w1, (1, 1), ((1, 1), (1, 1)),
                                 dimension_numbers=dn) + b1[None, :, None, None]
    y = jnp.maximum(y, 0.0)
    y = lax.conv_general_dilated(y, w2, (1, 1), ((1, 1), (1, 1)),
                                 dimension_numbers=dn) + b2[None, :, None, None]
    return jnp.maximum(x + y, 0.0)


if __name__ == "__main__":
    key = jax.random.PRNGKey(0)
    kx, k1, kb1, k2, kb2 = jax.random.split(key, 5)
    N, C, H, W = 2, 4, 16, 16

    x = jax.random.normal(kx, (N, C, H, W), jnp.float32)
    # deterministic synthetic parameters (Conv2d(C, C, 3, padding=1) shapes)
    w1 = 0.1 * jax.random.normal(k1, (C, C, 3, 3), jnp.float32)
    b1 = 0.1 * jax.random.normal(kb1, (C,), jnp.float32)
    w2 = 0.1 * jax.random.normal(k2, (C, C, 3, 3), jnp.float32)
    b2 = 0.1 * jax.random.normal(kb2, (C,), jnp.float32)

    out = jax.block_until_ready(residual_block_forward(x, w1, b1, w2, b2))
    ref = _reference(x, w1, b1, w2, b2)

    assert out.shape == (N, C, H, W)
    assert jnp.allclose(out, ref, atol=1e-4, rtol=1e-4), "mismatch vs reference"
    print("KERNEL_OK")
</pallas_src>

<mosaic_0001>
module attributes {stable_mosaic.version = 11 : i64} {
  func.func @_residual_block_kernel(%arg0: i32, %arg1: memref<1x8x1152xf32, #tpu.memory_space<vmem>>, %arg2: memref<2x8x384xf32, #tpu.memory_space<vmem>>, %arg3: memref<8x72xf32, #tpu.memory_space<vmem>>, %arg4: memref<8x1xf32, #tpu.memory_space<vmem>>, %arg5: memref<8x72xf32, #tpu.memory_space<vmem>>, %arg6: memref<8x1xf32, #tpu.memory_space<vmem>>, %arg7: memref<2x8x384xf32, #tpu.memory_space<vmem>>) attributes {dimension_semantics = [#tpu.dimension_semantics<parallel>], iteration_bounds = array<i64: 1>, scalar_prefetch = 0 : i64, scratch_operands = 0 : i64, tpu.core_type = #tpu.core_type<tc>, window_params = [{transform_indices = @transform_0, window_bounds = array<i64: 1, 8, 1152>}, {transform_indices = @transform_1, window_bounds = array<i64: 2, 8, 384>}, {pipeline_mode = #tpu.pipeline_mode<synchronous>, transform_indices = @transform_2, window_bounds = array<i64: 8, 72>}, {pipeline_mode = #tpu.pipeline_mode<synchronous>, transform_indices = @transform_3, window_bounds = array<i64: 8, 1>}, {pipeline_mode = #tpu.pipeline_mode<synchronous>, transform_indices = @transform_4, window_bounds = array<i64: 8, 72>}, {pipeline_mode = #tpu.pipeline_mode<synchronous>, transform_indices = @transform_5, window_bounds = array<i64: 8, 1>}, {transform_indices = @transform_6, window_bounds = array<i64: 2, 8, 384>}]} {
    %c0 = arith.constant 0 : index
    %c0_0 = arith.constant 0 : index
    %c0_1 = arith.constant 0 : index
    %0 = vector.load %arg1[%c0, %c0_0, %c0_1] : memref<1x8x1152xf32, #tpu.memory_space<vmem>>, vector<1x8x1152xf32>
    %1 = vector.shape_cast %0 : vector<1x8x1152xf32> to vector<8x1152xf32>
    %2 = tpu.iota {dimensions = array<i32: 1>} : vector<1x1024xi32>
    %3 = arith.sitofp %2 : vector<1x1024xi32> to vector<1x1024xf32>
    %cst = arith.constant 1.280000e+02 : f32
    %4 = vector.broadcast %cst : f32 to vector<1x1024xf32>
    %5 = arith.subf %3, %4 : vector<1x1024xf32>
    %cst_2 = arith.constant 0.000000e+00 : f32
    %6 = vector.broadcast %cst_2 : f32 to vector<1x1024xf32>
    %7 = arith.maximumf %5, %6 : vector<1x1024xf32>
    %cst_3 = arith.constant 3.840000e+02 : f32
    %8 = vector.broadcast %cst_3 : f32 to vector<1x1024xf32>
    %9 = arith.divf %7, %8 : vector<1x1024xf32>
    %10 = math.floor %9 : vector<1x1024xf32>
    %cst_4 = arith.constant 3.840000e+02 : f32
    %11 = vector.broadcast %cst_4 : f32 to vector<1x1024xf32>
    %12 = arith.mulf %10, %11 : vector<1x1024xf32>
    %13 = arith.subf %7, %12 : vector<1x1024xf32>
    %cst_5 = arith.constant 1.800000e+01 : f32
    %14 = vector.broadcast %cst_5 : f32 to vector<1x1024xf32>
    %15 = arith.divf %13, %14 : vector<1x1024xf32>
    %16 = math.floor %15 : vector<1x1024xf32>
    %cst_6 = arith.constant 1.800000e+01 : f32
    %17 = vector.broadcast %cst_6 : f32 to vector<1x1024xf32>
    %18 = arith.mulf %16, %17 : vector<1x1024xf32>
    %19 = arith.subf %13, %18 : vector<1x1024xf32>
    %cst_7 = arith.constant 0.000000e+00 : f32
    %20 = vector.broadcast %cst_7 : f32 to vector<1x1024xf32>
    %21 = arith.cmpf oge, %5, %20 : vector<1x1024xf32>
    %cst_8 = arith.constant 7.680000e+02 : f32
    %22 = vector.broadcast %cst_8 : f32 to vector<1x1024xf32>
    %23 = arith.cmpf olt, %5, %22 : vector<1x1024xf32>
    %24 = arith.andi %21, %23 : vector<1x1024xi1>
    %cst_9 = arith.constant 2.880000e+02 : f32
    %25 = vector.broadcast %cst_9 : f32 to vector<1x1024xf32>
    %26 = arith.cmpf olt, %13, %25 : vector<1x1024xf32>
    %27 = arith.andi %24, %26 : vector<1x1024xi1>
    %cst_10 = arith.constant 1.600000e+01 : f32
    %28 = vector.broadcast %cst_10 : f32 to vector<1x1024xf32>
    %29 = arith.cmpf olt, %19, %28 : vector<1x1024xf32>
    %30 = arith.andi %27, %29 : vector<1x1024xi1>
    %31 = arith.extui %30 : vector<1x1024xi1> to vector<1x1024xi32>
    %32 = arith.sitofp %31 : vector<1x1024xi32> to vector<1x1024xf32>
    %c0_11 = arith.constant 0 : index
    %c0_12 = arith.constant 0 : index
    %33 = vector.load %arg3[%c0_11, %c0_12] : memref<8x72xf32, #tpu.memory_space<vmem>>, vector<8x72xf32>
    %34 = vector.extract_strided_slice %1 {offsets = [0, 0], sizes = [8, 1024], strides = [1, 1]} : vector<8x1152xf32> to vector<8x1024xf32>
    %35 = vector.extract_strided_slice %1 {offsets = [0, 1], sizes = [8, 1024], strides = [1, 1]} : vector<8x1152xf32> to vector<8x1024xf32>
    %36 = vector.extract_strided_slice %1 {offsets = [0, 2], sizes = [8, 1024], strides = [1, 1]} : vector<8x1152xf32> to vector<8x1024xf32>
    %37 = vector.extract_strided_slice %1 {offsets = [0, 18], sizes = [8, 1024], strides = [1, 1]} : vector<8x1152xf32> to vector<8x1024xf32>
    %38 = vector.extract_strided_slice %1 {offsets = [0, 19], sizes = [8, 1024], strides = [1, 1]} : vector<8x1152xf32> to vector<8x1024xf32>
    %39 = vector.extract_strided_slice %1 {offsets = [0, 20], sizes = [8, 1024], strides = [1, 1]} : vector<8x1152xf32> to vector<8x1024xf32>
    %40 = vector.extract_strided_slice %1 {offsets = [0, 36], sizes = [8, 1024], strides = [1, 1]} : vector<8x1152xf32> to vector<8x1024xf32>
    %41 = vector.extract_strided_slice %1 {offsets = [0, 37], sizes = [8, 1024], strides = [1, 1]} : vector<8x1152xf32> to vector<8x1024xf32>
    %42 = vector.extract_strided_slice %1 {offsets = [0, 38], sizes = [8, 1024], strides = [1, 1]} : vector<8x1152xf32> to vector<8x1024xf32>
    %43 = tpu.concatenate %34, %35, %36, %37, %38, %39, %40, %41, %42 in 0 : vector<8x1024xf32>, vector<8x1024xf32>, vector<8x1024xf32>, vector<8x1024xf32>, vector<8x1024xf32>, vector<8x1024xf32>, vector<8x1024xf32>, vector<8x1024xf32>, vector<8x1024xf32> -> vector<72x1024xf32>
    %cst_13 = arith.constant dense<0.000000e+00> : vector<8x1024xf32>
    %44 = tpu.matmul %33, %43, %cst_13 {dimension_numbers = #tpu.dot_dimension_numbers<[1], [0], [0], [1], [0, 0, 1, 1], [], []>} : vector<8x72xf32>, vector<72x1024xf32>, vector<8x1024xf32> -> vector<8x1024xf32>
    %c0_14 = arith.constant 0 : index
    %c0_15 = arith.constant 0 : index
    %45 = vector.load %arg4[%c0_14, %c0_15] : memref<8x1xf32, #tpu.memory_space<vmem>>, vector<8x1xf32>
    %46 = vector.broadcast %45 : vector<8x1xf32> to vector<8x1024xf32>
    %47 = arith.addf %44, %46 : vector<8x1024xf32>
    %cst_16 = arith.constant 0.000000e+00 : f32
    %48 = vector.broadcast %cst_16 : f32 to vector<8x1024xf32>
    %49 = arith.maximumf %47, %48 : vector<8x1024xf32>
    %50 = vector.broadcast %32 : vector<1x1024xf32> to vector<8x1024xf32>
    %51 = arith.mulf %49, %50 : vector<8x1024xf32>
    %c0_17 = arith.constant 0 : index
    %c0_18 = arith.constant 0 : index
    %52 = vector.load %arg5[%c0_17, %c0_18] : memref<8x72xf32, #tpu.memory_space<vmem>>, vector<8x72xf32>
    %53 = vector.extract_strided_slice %51 {offsets = [0, 109], sizes = [8, 768], strides = [1, 1]} : vector<8x1024xf32> to vector<8x768xf32>
    %54 = vector.extract_strided_slice %51 {offsets = [0, 110], sizes = [8, 768], strides = [1, 1]} : vector<8x1024xf32> to vector<8x768xf32>
    %55 = vector.extract_strided_slice %51 {offsets = [0, 111], sizes = [8, 768], strides = [1, 1]} : vector<8x1024xf32> to vector<8x768xf32>
    %56 = vector.extract_strided_slice %51 {offsets = [0, 127], sizes = [8, 768], strides = [1, 1]} : vector<8x1024xf32> to vector<8x768xf32>
    %57 = vector.extract_strided_slice %51 {offsets = [0, 128], sizes = [8, 768], strides = [1, 1]} : vector<8x1024xf32> to vector<8x768xf32>
    %58 = vector.extract_strided_slice %51 {offsets = [0, 129], sizes = [8, 768], strides = [1, 1]} : vector<8x1024xf32> to vector<8x768xf32>
    %59 = vector.extract_strided_slice %51 {offsets = [0, 145], sizes = [8, 768], strides = [1, 1]} : vector<8x1024xf32> to vector<8x768xf32>
    %60 = vector.extract_strided_slice %51 {offsets = [0, 146], sizes = [8, 768], strides = [1, 1]} : vector<8x1024xf32> to vector<8x768xf32>
    %61 = vector.extract_strided_slice %51 {offsets = [0, 147], sizes = [8, 768], strides = [1, 1]} : vector<8x1024xf32> to vector<8x768xf32>
    %62 = tpu.concatenate %53, %54, %55, %56, %57, %58, %59, %60, %61 in 0 : vector<8x768xf32>, vector<8x768xf32>, vector<8x768xf32>, vector<8x768xf32>, vector<8x768xf32>, vector<8x768xf32>, vector<8x768xf32>, vector<8x768xf32>, vector<8x768xf32> -> vector<72x768xf32>
    %cst_19 = arith.constant dense<0.000000e+00> : vector<8x768xf32>
    %63 = tpu.matmul %52, %62, %cst_19 {dimension_numbers = #tpu.dot_dimension_numbers<[1], [0], [0], [1], [0, 0, 1, 1], [], []>} : vector<8x72xf32>, vector<72x768xf32>, vector<8x768xf32> -> vector<8x768xf32>
    %c0_20 = arith.constant 0 : index
    %c0_21 = arith.constant 0 : index
    %64 = vector.load %arg6[%c0_20, %c0_21] : memref<8x1xf32, #tpu.memory_space<vmem>>, vector<8x1xf32>
    %65 = vector.broadcast %64 : vector<8x1xf32> to vector<8x768xf32>
    %66 = arith.addf %63, %65 : vector<8x768xf32>
    %67 = vector.extract_strided_slice %66 {offsets = [0, 0], sizes = [8, 384], strides = [1, 1]} : vector<8x768xf32> to vector<8x384xf32>
    %c0_22 = arith.constant 0 : index
    %c0_23 = arith.constant 0 : index
    %c0_24 = arith.constant 0 : index
    %68 = vector.load %arg2[%c0_22, %c0_23, %c0_24] : memref<2x8x384xf32, #tpu.memory_space<vmem>>, vector<1x8x384xf32>
    %69 = vector.shape_cast %68 : vector<1x8x384xf32> to vector<8x384xf32>
    %70 = arith.addf %67, %69 : vector<8x384xf32>
    %cst_25 = arith.constant 0.000000e+00 : f32
    %71 = vector.broadcast %cst_25 : f32 to vector<8x384xf32>
    %72 = arith.maximumf %70, %71 : vector<8x384xf32>
    %c0_26 = arith.constant 0 : index
    %c0_27 = arith.constant 0 : index
    %c0_28 = arith.constant 0 : index
    %73 = vector.load %arg7[%c0_26, %c0_27, %c0_28] : memref<2x8x384xf32, #tpu.memory_space<vmem>>, vector<1x8x384xf32>
    %74 = vector.shape_cast %73 : vector<1x8x384xf32> to vector<8x384xf32>
    %75 = vector.shape_cast %72 : vector<8x384xf32> to vector<1x8x384xf32>
    tpu.vector_store %arg7[%c0_26, %c0_27, %c0_28], %75 {strides = array<i32>} : memref<2x8x384xf32, #tpu.memory_space<vmem>>, vector<1x8x384xf32>,
    %76 = vector.extract_strided_slice %66 {offsets = [0, 384], sizes = [8, 384], strides = [1, 1]} : vector<8x768xf32> to vector<8x384xf32>
    %c1 = arith.constant 1 : index
    %c0_29 = arith.constant 0 : index
    %c0_30 = arith.constant 0 : index
    %77 = vector.load %arg2[%c1, %c0_29, %c0_30] : memref<2x8x384xf32, #tpu.memory_space<vmem>>, vector<1x8x384xf32>
    %78 = vector.shape_cast %77 : vector<1x8x384xf32> to vector<8x384xf32>
    %79 = arith.addf %76, %78 : vector<8x384xf32>
    %cst_31 = arith.constant 0.000000e+00 : f32
    %80 = vector.broadcast %cst_31 : f32 to vector<8x384xf32>
    %81 = arith.maximumf %79, %80 : vector<8x384xf32>
    %c1_32 = arith.constant 1 : index
    %c0_33 = arith.constant 0 : index
    %c0_34 = arith.constant 0 : index
    %82 = vector.load %arg7[%c1_32, %c0_33, %c0_34] : memref<2x8x384xf32, #tpu.memory_space<vmem>>, vector<1x8x384xf32>
    %83 = vector.shape_cast %82 : vector<1x8x384xf32> to vector<8x384xf32>
    %84 = vector.shape_cast %81 : vector<8x384xf32> to vector<1x8x384xf32>
    tpu.vector_store %arg7[%c1_32, %c0_33, %c0_34], %84 {strides = array<i32>} : memref<2x8x384xf32, #tpu.memory_space<vmem>>, vector<1x8x384xf32>,
    return
  }
  func.func @transform_0(%arg0: i32) -> (i32, i32, i32) {
    %c0_i32 = arith.constant 0 : i32
    %c0_i32_0 = arith.constant 0 : i32
    %c0_i32_1 = arith.constant 0 : i32
    return %arg0, %c0_i32, %c0_i32_0 : i32, i32, i32
  }
  func.func @transform_1(%arg0: i32) -> (i32, i32, i32) {
    %c0_i32 = arith.constant 0 : i32
    %c0_i32_0 = arith.constant 0 : i32
    %c0_i32_1 = arith.constant 0 : i32
    return %arg0, %c0_i32, %c0_i32_0 : i32, i32, i32
  }
  func.func @transform_2(%arg0: i32) -> (i32, i32) {
    %c0_i32 = arith.constant 0 : i32
    %c0_i32_0 = arith.constant 0 : i32
    %c0_i32_1 = arith.constant 0 : i32
    return %c0_i32, %c0_i32_0 : i32, i32
  }
  func.func @transform_3(%arg0: i32) -> (i32, i32) {
    %c0_i32 = arith.constant 0 : i32
    %c0_i32_0 = arith.constant 0 : i32
    %c0_i32_1 = arith.constant 0 : i32
    return %c0_i32, %c0_i32_0 : i32, i32
  }
  func.func @transform_4(%arg0: i32) -> (i32, i32) {
    %c0_i32 = arith.constant 0 : i32
    %c0_i32_0 = arith.constant 0 : i32
    %c0_i32_1 = arith.constant 0 : i32
    return %c0_i32, %c0_i32_0 : i32, i32
  }
  func.func @transform_5(%arg0: i32) -> (i32, i32) {
    %c0_i32 = arith.constant 0 : i32
    %c0_i32_0 = arith.constant 0 : i32
    %c0_i32_1 = arith.constant 0 : i32
    return %c0_i32, %c0_i32_0 : i32, i32
  }
  func.func @transform_6(%arg0: i32) -> (i32, i32, i32) {
    %c0_i32 = arith.constant 0 : i32
    %c0_i32_0 = arith.constant 0 : i32
    %c0_i32_1 = arith.constant 0 : i32
    return %arg0, %c0_i32, %c0_i32_0 : i32, i32, i32
  }
}

</mosaic_0001>

<llo_original>
// kernel: tpu_custom_call.1
$region0: #{tpu_custom_call.1}
  #allocation0 [shape = 'u32[]', space=smem, size = 0x4, offset = 0x4, fixed_abs, tag = 'smem constant byte address 0x4 - core index']
  #allocation1 [shape = 'u32[144,128]{1,0:T(1,128)}', space=vmem, size = 0x12000, scoped, tag = 'internal scratch']
  %s0 = inlined_call_operand.hbm [shape: f32[1,8,1152], index: 0, kind: input, shape index: {}]
  %s1 = inlined_call_operand.hbm [shape: f32[2,8,384], index: 1, kind: input, shape index: {}]
  %s2 = inlined_call_operand.vmem [shape: f32[8,72], index: 2, kind: input, shape index: {}]
  %s3 = inlined_call_operand.vmem [shape: f32[8,1], index: 3, kind: input, shape index: {}]
  %s4 = inlined_call_operand.vmem [shape: f32[8,72], index: 4, kind: input, shape index: {}]
  %s5 = inlined_call_operand.vmem [shape: f32[8,1], index: 5, kind: input, shape index: {}]
  %s6 = inlined_call_operand.hbm [shape: f32[2,8,384], index: 6, kind: output, shape index: {}]
  %s7 = sld [smem:[#allocation0]]
  $region42: #{tpu_custom_call.1} parent=0
    _
  %s9 = ssub.s32 1, %s7
  %s10 = scalar_select 0, %s9, %s7
  $region1: #{tpu_custom_call.1} parent=0
    #allocation2 [shape = 'u8[36864]{0}', space=vmem, size = 0x9000, scoped, tag = 'input window, operand 0, single buffered']
    #allocation3 [shape = 's32[1]{0}', space=sflag, size = 0x4, scoped, tag = 'scoped memory for tpu_custom_call.1']
    #allocation4 [shape = 's32[1]{0}', space=sflag, size = 0x4, scoped, tag = 'scoped memory for tpu_custom_call.1']
    #allocation5 [shape = 'u8[24576]{0}', space=vmem, size = 0x6000, scoped, tag = 'input window, operand 1, single buffered']
    #allocation6 [shape = 's32[1]{0}', space=sflag, size = 0x4, scoped, tag = 'scoped memory for tpu_custom_call.1']
    #allocation7 [shape = 'u8[24576]{0}', space=vmem, size = 0x6000, scoped, tag = 'output window, operand 0, single buffered']
    %11 = vsyncpa [#allocation3], 0
    %12 = vsyncpa [#allocation6], 0
    %13 = vsyncpa [#allocation4], 0
    // Predicated region
    $region2: #{tpu_custom_call.1} parent=1 // pred_check
      _
    $region3: #{tpu_custom_call.1} parent=1 // pred_check_branch
      %15 = sbr.rel (0) target = $region5
    $region4: #{tpu_custom_call.1} parent=1 // pred_region
      %s17 = ssub.s32 1152, 1152
      %18 = vsyncadd [#allocation3], %s17
      %s20 = sshll.u32 [#allocation2], 4
      %s21 = int_to_ptr.vmem [resolvable:$true] %s20
      %23 = dma.hbm_to_vmem [thread:$0]  %s0, 1152, %s21, [#allocation3]
    $region5: #{tpu_custom_call.1} parent=1 // pred_fallthru
      _
    // Predicated region
    $region6: #{tpu_custom_call.1} parent=1 // pred_check
      _
    $region7: #{tpu_custom_call.1} parent=1 // pred_check_branch
      %25 = sbr.rel (0) target = $region9
    $region8: #{tpu_custom_call.1} parent=1 // pred_region
      %s27 = ssub.s32 768, 768
      %28 = vsyncadd [#allocation6], %s27
      %s29 = sshll.u32 [#allocation5], 4
      %s30 = int_to_ptr.vmem [resolvable:$true] %s29
      %35 = dma.hbm_to_vmem [thread:$0]  %s1, 768, %s30, [#allocation6], 384, 384, 24
    $region9: #{tpu_custom_call.1} parent=1 // pred_fallthru
      _
    // Predicated region
    $region10: #{tpu_custom_call.1} parent=1 // pred_check
      _
    $region11: #{tpu_custom_call.1} parent=1 // pred_check_branch
      %37 = sbr.rel (0) target = $region13
    $region12: #{tpu_custom_call.1} parent=1 // pred_region
      _
    $region13: #{tpu_custom_call.1} parent=1 // pred_fallthru
      _
    // Predicated region
    $region14: #{tpu_custom_call.1} parent=1 // pred_check
      _
    $region15: #{tpu_custom_call.1} parent=1 // pred_check_branch
      %39 = sbr.rel (0) target = $region17
    $region16: #{tpu_custom_call.1} parent=1 // pred_region
      _
    $region17: #{tpu_custom_call.1} parent=1 // pred_fallthru
      _
    // Predicated region
    $region18: #{tpu_custom_call.1} parent=1 // pred_check
      _
    $region19: #{tpu_custom_call.1} parent=1 // pred_check_branch
      %41 = sbr.rel (0) target = $region21
    $region20: #{tpu_custom_call.1} parent=1 // pred_region
      _
    $region21: #{tpu_custom_call.1} parent=1 // pred_fallthru
      _
    // Predicated region
    $region22: #{tpu_custom_call.1} parent=1 // pred_check
      _
    $region23: #{tpu_custom_call.1} parent=1 // pred_check_branch
      %43 = sbr.rel (0) target = $region25
    $region24: #{tpu_custom_call.1} parent=1 // pred_region
      _
    $region25: #{tpu_custom_call.1} parent=1 // pred_fallthru
      _
    // Predicated region
    $region26: #{tpu_custom_call.1} parent=1 // pred_check
      _
    $region27: #{tpu_custom_call.1} parent=1 // pred_check_branch
      %45 = sbr.rel (0) target = $region29
    $region28: #{tpu_custom_call.1} parent=1 // pred_region
      %46 = dma.done [#allocation3], 1152
    $region29: #{tpu_custom_call.1} parent=1 // pred_fallthru
      _
    // Predicated region
    $region30: #{tpu_custom_call.1} parent=1 // pred_check
      _
    $region31: #{tpu_custom_call.1} parent=1 // pred_check_branch
      %48 = sbr.rel (0) target = $region33
    $region32: #{tpu_custom_call.1} parent=1 // pred_region
      %49 = dma.done [#allocation6], 768
    $region33: #{tpu_custom_call.1} parent=1 // pred_fallthru
      _
    %v50 = vld [vmem:[#allocation2] sm:$0xff]
    %v51 = vld [vmem:[#allocation2 + $0x8] sm:$0xff]
    %v52 = vld [vmem:[#allocation2 + $0x10] sm:$0xff]
    %v53 = vld [vmem:[#allocation2 + $0x18] sm:$0xff]
    %v54 = vld [vmem:[#allocation2 + $0x20] sm:$0xff]
    %v55 = vld [vmem:[#allocation2 + $0x28] sm:$0xff]
    %v56 = vld [vmem:[#allocation2 + $0x30] sm:$0xff]
    %v57 = vld [vmem:[#allocation2 + $0x38] sm:$0xff]
    %v58 = vld [vmem:[#allocation2 + $0x40] sm:$0xff]
    %v59 = vlaneseq
    %v60 = vand.u32 %v59, 127
    %v61 = vadd.s32 %v60, 128
    %v62 = vadd.s32 %v60, 256
    %v63 = vadd.s32 %v60, 384
    %v64 = vadd.s32 %v60, 512
    %v65 = vadd.s32 %v60, 640
    %v66 = vadd.s32 %v60, 768
    %v67 = vadd.s32 %v60, 896
    %v68 = vcvt.s32.f32 %v60
    %v69 = vcvt.s32.f32 %v61
    %v70 = vcvt.s32.f32 %v62
    %v71 = vcvt.s32.f32 %v63
    %v72 = vcvt.s32.f32 %v64
    %v73 = vcvt.s32.f32 %v65
    %v74 = vcvt.s32.f32 %v66
    %v75 = vcvt.s32.f32 %v67
    %v76 = vsub.f32 %v68, 128.0
    %v77 = vsub.f32 %v69, 128.0
    %v78 = vsub.f32 %v70, 128.0
    %v79 = vsub.f32 %v71, 128.0
    %v80 = vsub.f32 %v72, 128.0
    %v81 = vsub.f32 %v73, 128.0
    %v82 = vsub.f32 %v74, 128.0
    %v83 = vsub.f32 %v75, 128.0
    %v84 = vmax.f32 %v76, 0.0
    %v85 = vmax.f32 %v77, 0.0
    %v86 = vmax.f32 %v78, 0.0
    %v87 = vmax.f32 %v79, 0.0
    %v88 = vmax.f32 %v80, 0.0
    %v89 = vmax.f32 %v81, 0.0
    %v90 = vmax.f32 %v82, 0.0
    %v91 = vmax.f32 %v83, 0.0
    %v92 = vrcp.pop 384.0
    %v93 = vmul.f32 %v84, %v92
    %v94 = vmul.f32 %v85, %v92
    %v95 = vmul.f32 %v86, %v92
    %v96 = vmul.f32 %v87, %v92
    %v97 = vmul.f32 %v88, %v92
    %v98 = vmul.f32 %v89, %v92
    %v99 = vmul.f32 %v90, %v92
    %v100 = vmul.f32 %v91, %v92
    %v101 = vfloor.f32 %v93
    %v102 = vfloor.f32 %v94
    %v103 = vfloor.f32 %v95
    %v104 = vfloor.f32 %v96
    %v105 = vfloor.f32 %v97
    %v106 = vfloor.f32 %v98
    %v107 = vfloor.f32 %v99
    %v108 = vfloor.f32 %v100
    %v109 = vmul.f32 %v101, 384.0
    %v110 = vmul.f32 %v102, 384.0
    %v111 = vmul.f32 %v103, 384.0
    %v112 = vmul.f32 %v104, 384.0
    %v113 = vmul.f32 %v105, 384.0
    %v114 = vmul.f32 %v106, 384.0
    %v115 = vmul.f32 %v107, 384.0
    %v116 = vmul.f32 %v108, 384.0
    %v117 = vsub.f32 %v84, %v109
    %v118 = vsub.f32 %v85, %v110
    %v119 = vsub.f32 %v86, %v111
    %v120 = vsub.f32 %v87, %v112
    %v121 = vsub.f32 %v88, %v113
    %v122 = vsub.f32 %v89, %v114
    %v123 = vsub.f32 %v90, %v115
    %v124 = vsub.f32 %v91, %v116
    %v125 = vrcp.pop 18.0
    %v126 = vmul.f32 %v117, %v125
    %v127 = vmul.f32 %v118, %v125
    %v128 = vmul.f32 %v119, %v125
    %v129 = vmul.f32 %v120, %v125
    %v130 = vmul.f32 %v121, %v125
    %v131 = vmul.f32 %v122, %v125
    %v132 = vmul.f32 %v123, %v125
    %v133 = vmul.f32 %v124, %v125
    %v134 = vfloor.f32 %v126
    %v135 = vfloor.f32 %v127
    %v136 = vfloor.f32 %v128
    %v137 = vfloor.f32 %v129
    %v138 = vfloor.f32 %v130
    %v139 = vfloor.f32 %v131
    %v140 = vfloor.f32 %v132
    %v141 = vfloor.f32 %v133
    %v142 = vmul.f32 %v134, 18.0
    %v143 = vmul.f32 %v135, 18.0
    %v144 = vmul.f32 %v136, 18.0
    %v145 = vmul.f32 %v137, 18.0
    %v146 = vmul.f32 %v138, 18.0
    %v147 = vmul.f32 %v139, 18.0
    %v148 = vmul.f32 %v140, 18.0
    %v149 = vmul.f32 %v141, 18.0
    %v150 = vsub.f32 %v117, %v142
    %v151 = vsub.f32 %v118, %v143
    %v152 = vsub.f32 %v119, %v144
    %v153 = vsub.f32 %v120, %v145
    %v154 = vsub.f32 %v121, %v146
    %v155 = vsub.f32 %v122, %v147
    %v156 = vsub.f32 %v123, %v148
    %v157 = vsub.f32 %v124, %v149
    %vm158 = vcmp.ge.f32.partialorder %v76, 0.0
    %vm159 = vcmp.ge.f32.partialorder %v77, 0.0
    %vm160 = vcmp.ge.f32.partialorder %v78, 0.0
    %vm161 = vcmp.ge.f32.partialorder %v79, 0.0
    %vm162 = vcmp.ge.f32.partialorder %v80, 0.0
    %vm163 = vcmp.ge.f32.partialorder %v81, 0.0
    %vm164 = vcmp.ge.f32.partialorder %v82, 0.0
    %vm165 = vcmp.ge.f32.partialorder %v83, 0.0
    %vm166 = vcmp.lt.f32.partialorder %v76, 768.0
    %vm167 = vcmp.lt.f32.partialorder %v77, 768.0
    %vm168 = vcmp.lt.f32.partialorder %v78, 768.0
    %vm169 = vcmp.lt.f32.partialorder %v79, 768.0
    %vm170 = vcmp.lt.f32.partialorder %v80, 768.0
    %vm171 = vcmp.lt.f32.partialorder %v81, 768.0
    %vm172 = vcmp.lt.f32.partialorder %v82, 768.0
    %vm173 = vcmp.lt.f32.partialorder %v83, 768.0
    %vm174 = vmand %vm158, %vm166
    %vm175 = vmand %vm159, %vm167
    %vm176 = vmand %vm160, %vm168
    %vm177 = vmand %vm161, %vm169
    %vm178 = vmand %vm162, %vm170
    %vm179 = vmand %vm163, %vm171
    %vm180 = vmand %vm164, %vm172
    %vm181 = vmand %vm165, %vm173
    %vm182 = vcmp.lt.f32.partialorder %v117, 288.0
    %vm183 = vcmp.lt.f32.partialorder %v118, 288.0
    %vm184 = vcmp.lt.f32.partialorder %v119, 288.0
    %vm185 = vcmp.lt.f32.partialorder %v120, 288.0
    %vm186 = vcmp.lt.f32.partialorder %v121, 288.0
    %vm187 = vcmp.lt.f32.partialorder %v122, 288.0
    %vm188 = vcmp.lt.f32.partialorder %v123, 288.0
    %vm189 = vcmp.lt.f32.partialorder %v124, 288.0
    %vm190 = vmand %vm174, %vm182
    %vm191 = vmand %vm175, %vm183
    %vm192 = vmand %vm176, %vm184
    %vm193 = vmand %vm177, %vm185
    %vm194 = vmand %vm178, %vm186
    %vm195 = vmand %vm179, %vm187
    %vm196 = vmand %vm180, %vm188
    %vm197 = vmand %vm181, %vm189
    %vm198 = vcmp.lt.f32.partialorder %v150, 16.0
    %vm199 = vcmp.lt.f32.partialorder %v151, 16.0
    %vm200 = vcmp.lt.f32.partialorder %v152, 16.0
    %vm201 = vcmp.lt.f32.partialorder %v153, 16.0
    %vm202 = vcmp.lt.f32.partialorder %v154, 16.0
    %vm203 = vcmp.lt.f32.partialorder %v155, 16.0
    %vm204 = vcmp.lt.f32.partialorder %v156, 16.0
    %vm205 = vcmp.lt.f32.partialorder %v157, 16.0
    %vm206 = vmand %vm190, %vm198
    %vm207 = vmand %vm191, %vm199
    %vm208 = vmand %vm192, %vm200
    %vm209 = vmand %vm193, %vm201
    %vm210 = vmand %vm194, %vm202
    %vm211 = vmand %vm195, %vm203
    %vm212 = vmand %vm196, %vm204
    %vm213 = vmand %vm197, %vm205
    %v214 = vsel %vm206, 1, 0
    %v215 = vsel %vm207, 1, 0
    %v216 = vsel %vm208, 1, 0
    %v217 = vsel %vm209, 1, 0
    %v218 = vsel %vm210, 1, 0
    %v219 = vsel %vm211, 1, 0
    %v220 = vsel %vm212, 1, 0
    %v221 = vsel %vm213, 1, 0
    %v222 = vcvt.s32.f32 %v214
    %v223 = vcvt.s32.f32 %v215
    %v224 = vcvt.s32.f32 %v216
    %v225 = vcvt.s32.f32 %v217
    %v226 = vcvt.s32.f32 %v218
    %v227 = vcvt.s32.f32 %v219
    %v228 = vcvt.s32.f32 %v220
    %v229 = vcvt.s32.f32 %v221
    %v230 = vld [vmem:[%s2] sm:$0xff]
    %240 = vrot.lane.b32.xlu0 %v50, 127
    %v241 = vpop.permute.xlu0 %240
    %242 = vrot.lane.b32.xlu0 %v51, 127
    %v243 = vpop.permute.xlu0 %242
    %244 = vrot.lane.b32.xlu0 %v52, 127
    %v245 = vpop.permute.xlu0 %244
    %246 = vrot.lane.b32.xlu0 %v53, 127
    %v247 = vpop.permute.xlu0 %246
    %248 = vrot.lane.b32.xlu0 %v54, 127
    %v249 = vpop.permute.xlu0 %248
    %250 = vrot.lane.b32.xlu0 %v55, 127
    %v251 = vpop.permute.xlu0 %250
    %252 = vrot.lane.b32.xlu0 %v56, 127
    %v253 = vpop.permute.xlu0 %252
    %254 = vrot.lane.b32.xlu0 %v57, 127
    %v255 = vpop.permute.xlu0 %254
    %256 = vrot.lane.b32.xlu0 %v58, 127
    %v257 = vpop.permute.xlu0 %256
    %vm258 = vcmask 1039360
    %v259 = vsel %vm258, %v241, %v243
    %v260 = vsel %vm258, %v243, %v245
    %v261 = vsel %vm258, %v245, %v247
    %v262 = vsel %vm258, %v247, %v249
    %v263 = vsel %vm258, %v249, %v251
    %v264 = vsel %vm258, %v251, %v253
    %v265 = vsel %vm258, %v253, %v255
    %v266 = vsel %vm258, %v255, %v257
    %275 = vrot.lane.b32.xlu0 %v50, 126
    %v276 = vpop.permute.xlu0 %275
    %277 = vrot.lane.b32.xlu0 %v51, 126
    %v278 = vpop.permute.xlu0 %277
    %279 = vrot.lane.b32.xlu0 %v52, 126
    %v280 = vpop.permute.xlu0 %279
    %281 = vrot.lane.b32.xlu0 %v53, 126
    %v282 = vpop.permute.xlu0 %281
    %283 = vrot.lane.b32.xlu0 %v54, 126
    %v284 = vpop.permute.xlu0 %283
    %285 = vrot.lane.b32.xlu0 %v55, 126
    %v286 = vpop.permute.xlu0 %285
    %287 = vrot.lane.b32.xlu0 %v56, 126
    %v288 = vpop.permute.xlu0 %287
    %289 = vrot.lane.b32.xlu0 %v57, 126
    %v290 = vpop.permute.xlu0 %289
    %291 = vrot.lane.b32.xlu0 %v58, 126
    %v292 = vpop.permute.xlu0 %291
    %vm293 = vcmask 1031168
    %v294 = vsel %vm293, %v276, %v278
    %v295 = vsel %vm293, %v278, %v280
    %v296 = vsel %vm293, %v280, %v282
    %v297 = vsel %vm293, %v282, %v284
    %v298 = vsel %vm293, %v284, %v286
    %v299 = vsel %vm293, %v286, %v288
    %v300 = vsel %vm293, %v288, %v290
    %v301 = vsel %vm293, %v290, %v292
    %310 = vrot.lane.b32.xlu0 %v50, 110
    %v311 = vpop.permute.xlu0 %310
    %312 = vrot.lane.b32.xlu0 %v51, 110
    %v313 = vpop.permute.xlu0 %312
    %314 = vrot.lane.b32.xlu0 %v52, 110
    %v315 = vpop.permute.xlu0 %314
    %316 = vrot.lane.b32.xlu0 %v53, 110
    %v317 = vpop.permute.xlu0 %316
    %318 = vrot.lane.b32.xlu0 %v54, 110
    %v319 = vpop.permute.xlu0 %318
    %320 = vrot.lane.b32.xlu0 %v55, 110
    %v321 = vpop.permute.xlu0 %320
    %322 = vrot.lane.b32.xlu0 %v56, 110
    %v323 = vpop.permute.xlu0 %322
    %324 = vrot.lane.b32.xlu0 %v57, 110
    %v325 = vpop.permute.xlu0 %324
    %326 = vrot.lane.b32.xlu0 %v58, 110
    %v327 = vpop.permute.xlu0 %326
    %vm328 = vcmask 900096
    %v329 = vsel %vm328, %v311, %v313
    %v330 = vsel %vm328, %v313, %v315
    %v331 = vsel %vm328, %v315, %v317
    %v332 = vsel %vm328, %v317, %v319
    %v333 = vsel %vm328, %v319, %v321
    %v334 = vsel %vm328, %v321, %v323
    %v335 = vsel %vm328, %v323, %v325
    %v336 = vsel %vm328, %v325, %v327
    %345 = vrot.lane.b32.xlu0 %v50, 109
    %v346 = vpop.permute.xlu0 %345
    %347 = vrot.lane.b32.xlu0 %v51, 109
    %v348 = vpop.permute.xlu0 %347
    %349 = vrot.lane.b32.xlu0 %v52, 109
    %v350 = vpop.permute.xlu0 %349
    %351 = vrot.lane.b32.xlu0 %v53, 109
    %v352 = vpop.permute.xlu0 %351
    %353 = vrot.lane.b32.xlu0 %v54, 109
    %v354 = vpop.permute.xlu0 %353
    %355 = vrot.lane.b32.xlu0 %v55, 109
    %v356 = vpop.permute.xlu0 %355
    %357 = vrot.lane.b32.xlu0 %v56, 109
    %v358 = vpop.permute.xlu0 %357
    %359 = vrot.lane.b32.xlu0 %v57, 109
    %v360 = vpop.permute.xlu0 %359
    %361 = vrot.lane.b32.xlu0 %v58, 109
    %v362 = vpop.permute.xlu0 %361
    %vm363 = vcmask 891904
    %v364 = vsel %vm363, %v346, %v348
    %v365 = vsel %vm363, %v348, %v350
    %v366 = vsel %vm363, %v350, %v352
    %v367 = vsel %vm363, %v352, %v354
    %v368 = vsel %vm363, %v354, %v356
    %v369 = vsel %vm363, %v356, %v358
    %v370 = vsel %vm363, %v358, %v360
    %v371 = vsel %vm363, %v360, %v362
    %380 = vrot.lane.b32.xlu0 %v50, 108
    %v381 = vpop.permute.xlu0 %380
    %382 = vrot.lane.b32.xlu0 %v51, 108
    %v383 = vpop.permute.xlu0 %382
    %384 = vrot.lane.b32.xlu0 %v52, 108
    %v385 = vpop.permute.xlu0 %384
    %386 = vrot.lane.b32.xlu0 %v53, 108
    %v387 = vpop.permute.xlu0 %386
    %388 = vrot.lane.b32.xlu0 %v54, 108
    %v389 = vpop.permute.xlu0 %388
    %390 = vrot.lane.b32.xlu0 %v55, 108
    %v391 = vpop.permute.xlu0 %390
    %392 = vrot.lane.b32.xlu0 %v56, 108
    %v393 = vpop.permute.xlu0 %392
    %394 = vrot.lane.b32.xlu0 %v57, 108
    %v395 = vpop.permute.xlu0 %394
    %396 = vrot.lane.b32.xlu0 %v58, 108
    %v397 = vpop.permute.xlu0 %396
    %vm398 = vcmask 883712
    %v399 = vsel %vm398, %v381, %v383
    %v400 = vsel %vm398, %v383, %v385
    %v401 = vsel %vm398, %v385, %v387
    %v402 = vsel %vm398, %v387, %v389
    %v403 = vsel %vm398, %v389, %v391
    %v404 = vsel %vm398, %v391, %v393
    %v405 = vsel %vm398, %v393, %v395
    %v406 = vsel %vm398, %v395, %v397
    %415 = vrot.lane.b32.xlu0 %v50, 92
    %v416 = vpop.permute.xlu0 %415
    %417 = vrot.lane.b32.xlu0 %v51, 92
    %v418 = vpop.permute.xlu0 %417
    %419 = vrot.lane.b32.xlu0 %v52, 92
    %v420 = vpop.permute.xlu0 %419
    %421 = vrot.lane.b32.xlu0 %v53, 92
    %v422 = vpop.permute.xlu0 %421
    %423 = vrot.lane.b32.xlu0 %v54, 92
    %v424 = vpop.permute.xlu0 %423
    %425 = vrot.lane.b32.xlu0 %v55, 92
    %v426 = vpop.permute.xlu0 %425
    %427 = vrot.lane.b32.xlu0 %v56, 92
    %v428 = vpop.permute.xlu0 %427
    %429 = vrot.lane.b32.xlu0 %v57, 92
    %v430 = vpop.permute.xlu0 %429
    %431 = vrot.lane.b32.xlu0 %v58, 92
    %v432 = vpop.permute.xlu0 %431
    %vm433 = vcmask 752640
    %v434 = vsel %vm433, %v416, %v418
    %v435 = vsel %vm433, %v418, %v420
    %v436 = vsel %vm433, %v420, %v422
    %v437 = vsel %vm433, %v422, %v424
    %v438 = vsel %vm433, %v424, %v426
    %v439 = vsel %vm433, %v426, %v428
    %v440 = vsel %vm433, %v428, %v430
    %v441 = vsel %vm433, %v430, %v432
    %450 = vrot.lane.b32.xlu0 %v50, 91
    %v451 = vpop.permute.xlu0 %450
    %452 = vrot.lane.b32.xlu0 %v51, 91
    %v453 = vpop.permute.xlu0 %452
    %454 = vrot.lane.b32.xlu0 %v52, 91
    %v455 = vpop.permute.xlu0 %454
    %456 = vrot.lane.b32.xlu0 %v53, 91
    %v457 = vpop.permute.xlu0 %456
    %458 = vrot.lane.b32.xlu0 %v54, 91
    %v459 = vpop.permute.xlu0 %458
    %460 = vrot.lane.b32.xlu0 %v55, 91
    %v461 = vpop.permute.xlu0 %460
    %462 = vrot.lane.b32.xlu0 %v56, 91
    %v463 = vpop.permute.xlu0 %462
    %464 = vrot.lane.b32.xlu0 %v57, 91
    %v465 = vpop.permute.xlu0 %464
    %466 = vrot.lane.b32.xlu0 %v58, 91
    %v467 = vpop.permute.xlu0 %466
    %vm468 = vcmask 744448
    %v469 = vsel %vm468, %v451, %v453
    %v470 = vsel %vm468, %v453, %v455
    %v471 = vsel %vm468, %v455, %v457
    %v472 = vsel %vm468, %v457, %v459
    %v473 = vsel %vm468, %v459, %v461
    %v474 = vsel %vm468, %v461, %v463
    %v475 = vsel %vm468, %v463, %v465
    %v476 = vsel %vm468, %v465, %v467
    %485 = vrot.lane.b32.xlu0 %v50, 90
    %v486 = vpop.permute.xlu0 %485
    %487 = vrot.lane.b32.xlu0 %v51, 90
    %v488 = vpop.permute.xlu0 %487
    %489 = vrot.lane.b32.xlu0 %v52, 90
    %v490 = vpop.permute.xlu0 %489
    %491 = vrot.lane.b32.xlu0 %v53, 90
    %v492 = vpop.permute.xlu0 %491
    %493 = vrot.lane.b32.xlu0 %v54, 90
    %v494 = vpop.permute.xlu0 %493
    %495 = vrot.lane.b32.xlu0 %v55, 90
    %v496 = vpop.permute.xlu0 %495
    %497 = vrot.lane.b32.xlu0 %v56, 90
    %v498 = vpop.permute.xlu0 %497
    %499 = vrot.lane.b32.xlu0 %v57, 90
    %v500 = vpop.permute.xlu0 %499
    %501 = vrot.lane.b32.xlu0 %v58, 90
    %v502 = vpop.permute.xlu0 %501
    %vm503 = vcmask 736256
    %v504 = vsel %vm503, %v486, %v488
    %v505 = vsel %vm503, %v488, %v490
    %v506 = vsel %vm503, %v490, %v492
    %v507 = vsel %vm503, %v492, %v494
    %v508 = vsel %vm503, %v494, %v496
    %v509 = vsel %vm503, %v496, %v498
    %v510 = vsel %vm503, %v498, %v500
    %v511 = vsel %vm503, %v500, %v502
    %v520 = vld [vmem:[%s3] sm:$0xff]
    %522 = vset.pattern.permute.xlu0 0
    %523 = vperm.xlu0 %522, %v520
    %v524 = vpop.permute.xlu0 %523
    %vm526 = vcmask 588800
    %v528 = vsel %vm526, %v230, 0
    %530 = vmatprep.subr.mxu0 0.0
    %531 = vmatpush1.msra.mxu0 0.0
    %532 = vmatprep.subr.mxu0 0.0
    %533 = vmatpush1.msra.mxu0 0.0
    %534 = vmatprep.subr.mxu0 0.0
    %535 = vmatpush1.msra.mxu0 0.0
    %536 = vmatprep.subr.mxu0 0.0
    %537 = vmatpush1.msra.mxu0 0.0
    %538 = vmatprep.subr.mxu0 0.0
    %539 = vmatpush1.msra.mxu0 0.0
    %540 = vmatprep.subr.mxu0 0.0
    %541 = vmatpush1.msra.mxu0 0.0
    %542 = vmatprep.subr.mxu0 0.0
    %543 = vmatpush1.msra.mxu0 0.0
    %544 = vmatprep.subr.mxu0 %v505
    %545 = vmatpush1.msra.mxu0 %v504
    %546 = vmatprep.subr.mxu0 %v470
    %547 = vmatpush1.msra.mxu0 %v469
    %548 = vmatprep.subr.mxu0 %v435
    %549 = vmatpush1.msra.mxu0 %v434
    %550 = vmatprep.subr.mxu0 %v400
    %551 = vmatpush1.msra.mxu0 %v399
    %552 = vmatprep.subr.mxu0 %v365
    %553 = vmatpush1.msra.mxu0 %v364
    %554 = vmatprep.subr.mxu0 %v330
    %555 = vmatpush1.msra.mxu0 %v329
    %556 = vmatprep.subr.mxu0 %v295
    %557 = vmatpush1.msra.mxu0 %v294
    %558 = vmatprep.subr.mxu0 %v260
    %559 = vmatpush1.msra.mxu0 %v259
    %560 = vmatprep.subr.mxu0 %v51
    %561 = vmatpush1.msra.mxu0 %v50
    %562 = vmatprep.subr.mxu0 0.0
    %563 = vmatpush2.msra.mxu0 0.0
    %564 = vmatprep.subr.mxu0 0.0
    %565 = vmatpush2.msra.mxu0 0.0
    %566 = vmatprep.subr.mxu0 0.0
    %567 = vmatpush2.msra.mxu0 0.0
    %568 = vmatprep.subr.mxu0 0.0
    %569 = vmatpush2.msra.mxu0 0.0
    %570 = vmatprep.subr.mxu0 0.0
    %571 = vmatpush2.msra.mxu0 0.0
    %572 = vmatprep.subr.mxu0 0.0
    %573 = vmatpush2.msra.mxu0 0.0
    %574 = vmatprep.subr.mxu0 0.0
    %575 = vmatpush2.msra.mxu0 0.0
    %576 = vmatprep.subr.mxu0 0.0
    %577 = vmatpush2.msra.mxu0 0.0
    %578 = vmatprep.subr.mxu0 0.0
    %579 = vmatpush2.msra.mxu0 0.0
    %580 = vmatprep.subr.mxu0 0.0
    %581 = vmatpush2.msra.mxu0 0.0
    %582 = vmatprep.subr.mxu0 0.0
    %583 = vmatpush2.msra.mxu0 0.0
    %584 = vmatprep.subr.mxu0 0.0
    %585 = vmatpush2.msra.mxu0 0.0
    %586 = vmatprep.subr.mxu0 0.0
    %587 = vmatpush2.msra.mxu0 0.0
    %588 = vmatprep.subr.mxu0 0.0
    %589 = vmatpush2.msra.mxu0 0.0
    %590 = vmatprep.subr.mxu0 0.0
    %591 = vmatpush2.msra.mxu0 0.0
    %592 = vmatprep.subr.mxu0 0.0
    %593 = vmatpush2.msra.mxu0 0.0
    %594 = vmatprep.mubr.f32.mxu0 0.0
    %595 = vmatmul.mubr.f32.gmra.mxu0 %v528
    %v596 = vpop.f32.mrf.mxu0
    %v597 = vadd.f32 %v524, %v596
    %v598 = vpop.f32.mrf.mxu0
    %v599 = vadd.f32 %v524, %v598
    %600 = vdwg.mxu0
    %601 = vmatprep.subr.mxu0 0.0
    %602 = vmatpush1.msra.mxu0 0.0
    %603 = vmatprep.subr.mxu0 0.0
    %604 = vmatpush1.msra.mxu0 0.0
    %605 = vmatprep.subr.mxu0 0.0
    %606 = vmatpush1.msra.mxu0 0.0
    %607 = vmatprep.subr.mxu0 0.0
    %608 = vmatpush1.msra.mxu0 0.0
    %609 = vmatprep.subr.mxu0 0.0
    %610 = vmatpush1.msra.mxu0 0.0
    %611 = vmatprep.subr.mxu0 0.0
    %612 = vmatpush1.msra.mxu0 0.0
    %613 = vmatprep.subr.mxu0 0.0
    %614 = vmatpush1.msra.mxu0 0.0
    %615 = vmatprep.subr.mxu0 %v507
    %616 = vmatpush1.msra.mxu0 %v506
    %617 = vmatprep.subr.mxu0 %v472
    %618 = vmatpush1.msra.mxu0 %v471
    %619 = vmatprep.subr.mxu0 %v437
    %620 = vmatpush1.msra.mxu0 %v436
    %621 = vmatprep.subr.mxu0 %v402
    %622 = vmatpush1.msra.mxu0 %v401
    %623 = vmatprep.subr.mxu0 %v367
    %624 = vmatpush1.msra.mxu0 %v366
    %625 = vmatprep.subr.mxu0 %v332
    %626 = vmatpush1.msra.mxu0 %v331
    %627 = vmatprep.subr.mxu0 %v297
    %628 = vmatpush1.msra.mxu0 %v296
    %629 = vmatprep.subr.mxu0 %v262
    %630 = vmatpush1.msra.mxu0 %v261
    %631 = vmatprep.subr.mxu0 %v53
    %632 = vmatpush1.msra.mxu0 %v52
    %633 = vmatprep.subr.mxu0 0.0
    %634 = vmatpush2.msra.mxu0 0.0
    %635 = vmatprep.subr.mxu0 0.0
    %636 = vmatpush2.msra.mxu0 0.0
    %637 = vmatprep.subr.mxu0 0.0
    %638 = vmatpush2.msra.mxu0 0.0
    %639 = vmatprep.subr.mxu0 0.0
    %640 = vmatpush2.msra.mxu0 0.0
    %641 = vmatprep.subr.mxu0 0.0
    %642 = vmatpush2.msra.mxu0 0.0
    %643 = vmatprep.subr.mxu0 0.0
    %644 = vmatpush2.msra.mxu0 0.0
    %645 = vmatprep.subr.mxu0 0.0
    %646 = vmatpush2.msra.mxu0 0.0
    %647 = vmatprep.subr.mxu0 0.0
    %648 = vmatpush2.msra.mxu0 0.0
    %649 = vmatprep.subr.mxu0 0.0
    %650 = vmatpush2.msra.mxu0 0.0
    %651 = vmatprep.subr.mxu0 0.0
    %652 = vmatpush2.msra.mxu0 0.0
    %653 = vmatprep.subr.mxu0 0.0
    %654 = vmatpush2.msra.mxu0 0.0
    %655 = vmatprep.subr.mxu0 0.0
    %656 = vmatpush2.msra.mxu0 0.0
    %657 = vmatprep.subr.mxu0 0.0
    %658 = vmatpush2.msra.mxu0 0.0
    %659 = vmatprep.subr.mxu0 0.0
    %660 = vmatpush2.msra.mxu0 0.0
    %661 = vmatprep.subr.mxu0 0.0
    %662 = vmatpush2.msra.mxu0 0.0
    %663 = vmatprep.subr.mxu0 0.0
    %664 = vmatpush2.msra.mxu0 0.0
    %665 = vmatprep.mubr.f32.mxu0 0.0
    %666 = vmatmul.mubr.f32.gmra.mxu0 %v528
    %v667 = vpop.f32.mrf.mxu0
    %v668 = vadd.f32 %v524, %v667
    %v669 = vpop.f32.mrf.mxu0
    %v670 = vadd.f32 %v524, %v669
    %671 = vdwg.mxu0
    %672 = vmatprep.subr.mxu0 0.0
    %673 = vmatpush1.msra.mxu0 0.0
    %674 = vmatprep.subr.mxu0 0.0
    %675 = vmatpush1.msra.mxu0 0.0
    %676 = vmatprep.subr.mxu0 0.0
    %677 = vmatpush1.msra.mxu0 0.0
    %678 = vmatprep.subr.mxu0 0.0
    %679 = vmatpush1.msra.mxu0 0.0
    %680 = vmatprep.subr.mxu0 0.0
    %681 = vmatpush1.msra.mxu0 0.0
    %682 = vmatprep.subr.mxu0 0.0
    %683 = vmatpush1.msra.mxu0 0.0
    %684 = vmatprep.subr.mxu0 0.0
    %685 = vmatpush1.msra.mxu0 0.0
    %686 = vmatprep.subr.mxu0 %v509
    %687 = vmatpush1.msra.mxu0 %v508
    %688 = vmatprep.subr.mxu0 %v474
    %689 = vmatpush1.msra.mxu0 %v473
    %690 = vmatprep.subr.mxu0 %v439
    %691 = vmatpush1.msra.mxu0 %v438
    %692 = vmatprep.subr.mxu0 %v404
    %693 = vmatpush1.msra.mxu0 %v403
    %694 = vmatprep.subr.mxu0 %v369
    %695 = vmatpush1.msra.mxu0 %v368
    %696 = vmatprep.subr.mxu0 %v334
    %697 = vmatpush1.msra.mxu0 %v333
    %698 = vmatprep.subr.mxu0 %v299
    %699 = vmatpush1.msra.mxu0 %v298
    %700 = vmatprep.subr.mxu0 %v264
    %701 = vmatpush1.msra.mxu0 %v263
    %702 = vmatprep.subr.mxu0 %v55
    %703 = vmatpush1.msra.mxu0 %v54
    %704 = vmatprep.subr.mxu0 0.0
    %705 = vmatpush2.msra.mxu0 0.0
    %706 = vmatprep.subr.mxu0 0.0
    %707 = vmatpush2.msra.mxu0 0.0
    %708 = vmatprep.subr.mxu0 0.0
    %709 = vmatpush2.msra.mxu0 0.0
    %710 = vmatprep.subr.mxu0 0.0
    %711 = vmatpush2.msra.mxu0 0.0
    %712 = vmatprep.subr.mxu0 0.0
    %713 = vmatpush2.msra.mxu0 0.0
    %714 = vmatprep.subr.mxu0 0.0
    %715 = vmatpush2.msra.mxu0 0.0
    %716 = vmatprep.subr.mxu0 0.0
    %717 = vmatpush2.msra.mxu0 0.0
    %718 = vmatprep.subr.mxu0 0.0
    %719 = vmatpush2.msra.mxu0 0.0
    %720 = vmatprep.subr.mxu0 0.0
    %721 = vmatpush2.msra.mxu0 0.0
    %722 = vmatprep.subr.mxu0 0.0
    %723 = vmatpush2.msra.mxu0 0.0
    %724 = vmatprep.subr.mxu0 0.0
    %725 = vmatpush2.msra.mxu0 0.0
    %726 = vmatprep.subr.mxu0 0.0
    %727 = vmatpush2.msra.mxu0 0.0
    %728 = vmatprep.subr.mxu0 0.0
    %729 = vmatpush2.msra.mxu0 0.0
    %730 = vmatprep.subr.mxu0 0.0
    %731 = vmatpush2.msra.mxu0 0.0
    %732 = vmatprep.subr.mxu0 0.0
    %733 = vmatpush2.msra.mxu0 0.0
    %734 = vmatprep.subr.mxu0 0.0
    %735 = vmatpush2.msra.mxu0 0.0
    %736 = vmatprep.mubr.f32.mxu0 0.0
    %737 = vmatmul.mubr.f32.gmra.mxu0 %v528
    %v738 = vpop.f32.mrf.mxu0
    %v739 = vadd.f32 %v524, %v738
    %v740 = vpop.f32.mrf.mxu0
    %v741 = vadd.f32 %v524, %v740
    %742 = vdwg.mxu0
    %743 = vmatprep.subr.mxu0 0.0
    %744 = vmatpush1.msra.mxu0 0.0
    %745 = vmatprep.subr.mxu0 0.0
    %746 = vmatpush1.msra.mxu0 0.0
    %747 = vmatprep.subr.mxu0 0.0
    %748 = vmatpush1.msra.mxu0 0.0
    %749 = vmatprep.subr.mxu0 0.0
    %750 = vmatpush1.msra.mxu0 0.0
    %751 = vmatprep.subr.mxu0 0.0
    %752 = vmatpush1.msra.mxu0 0.0
    %753 = vmatprep.subr.mxu0 0.0
    %754 = vmatpush1.msra.mxu0 0.0
    %755 = vmatprep.subr.mxu0 0.0
    %756 = vmatpush1.msra.mxu0 0.0
    %757 = vmatprep.subr.mxu0 %v511
    %758 = vmatpush1.msra.mxu0 %v510
    %759 = vmatprep.subr.mxu0 %v476
    %760 = vmatpush1.msra.mxu0 %v475
    %761 = vmatprep.subr.mxu0 %v441
    %762 = vmatpush1.msra.mxu0 %v440
    %763 = vmatprep.subr.mxu0 %v406
    %764 = vmatpush1.msra.mxu0 %v405
    %765 = vmatprep.subr.mxu0 %v371
    %766 = vmatpush1.msra.mxu0 %v370
    %767 = vmatprep.subr.mxu0 %v336
    %768 = vmatpush1.msra.mxu0 %v335
    %769 = vmatprep.subr.mxu0 %v301
    %770 = vmatpush1.msra.mxu0 %v300
    %771 = vmatprep.subr.mxu0 %v266
    %772 = vmatpush1.msra.mxu0 %v265
    %773 = vmatprep.subr.mxu0 %v57
    %774 = vmatpush1.msra.mxu0 %v56
    %775 = vmatprep.subr.mxu0 0.0
    %776 = vmatpush2.msra.mxu0 0.0
    %777 = vmatprep.subr.mxu0 0.0
    %778 = vmatpush2.msra.mxu0 0.0
    %779 = vmatprep.subr.mxu0 0.0
    %780 = vmatpush2.msra.mxu0 0.0
    %781 = vmatprep.subr.mxu0 0.0
    %782 = vmatpush2.msra.mxu0 0.0
    %783 = vmatprep.subr.mxu0 0.0
    %784 = vmatpush2.msra.mxu0 0.0
    %785 = vmatprep.subr.mxu0 0.0
    %786 = vmatpush2.msra.mxu0 0.0
    %787 = vmatprep.subr.mxu0 0.0
    %788 = vmatpush2.msra.mxu0 0.0
    %789 = vmatprep.subr.mxu0 0.0
    %790 = vmatpush2.msra.mxu0 0.0
    %791 = vmatprep.subr.mxu0 0.0
    %792 = vmatpush2.msra.mxu0 0.0
    %793 = vmatprep.subr.mxu0 0.0
    %794 = vmatpush2.msra.mxu0 0.0
    %795 = vmatprep.subr.mxu0 0.0
    %796 = vmatpush2.msra.mxu0 0.0
    %797 = vmatprep.subr.mxu0 0.0
    %798 = vmatpush2.msra.mxu0 0.0
    %799 = vmatprep.subr.mxu0 0.0
    %800 = vmatpush2.msra.mxu0 0.0
    %801 = vmatprep.subr.mxu0 0.0
    %802 = vmatpush2.msra.mxu0 0.0
    %803 = vmatprep.subr.mxu0 0.0
    %804 = vmatpush2.msra.mxu0 0.0
    %805 = vmatprep.subr.mxu0 0.0
    %806 = vmatpush2.msra.mxu0 0.0
    %807 = vmatprep.mubr.f32.mxu0 0.0
    %808 = vmatmul.mubr.f32.gmra.mxu0 %v528
    %v809 = vpop.f32.mrf.mxu0
    %v810 = vadd.f32 %v524, %v809
    %v811 = vpop.f32.mrf.mxu0
    %v812 = vadd.f32 %v524, %v811
    %813 = vdwg.mxu0
    %v814 = vmax.f32 %v597, 0.0
    %v815 = vmax.f32 %v599, 0.0
    %v816 = vmax.f32 %v668, 0.0
    %v817 = vmax.f32 %v670, 0.0
    %v818 = vmax.f32 %v739, 0.0
    %v819 = vmax.f32 %v741, 0.0
    %v820 = vmax.f32 %v810, 0.0
    %v821 = vmax.f32 %v812, 0.0
    %v822 = vmul.f32 %v814, %v222
    %v823 = vmul.f32 %v815, %v223
    %v824 = vmul.f32 %v816, %v224
    %v825 = vmul.f32 %v817, %v225
    %v826 = vmul.f32 %v818, %v226
    %v827 = vmul.f32 %v819, %v227
    %v828 = vmul.f32 %v820, %v228
    %v829 = vmul.f32 %v821, %v229
    %v830 = vld [vmem:[%s4] sm:$0xff]
    %838 = vrot.lane.b32.xlu0 %v822, 127
    %v839 = vpop.permute.xlu0 %838
    %840 = vrot.lane.b32.xlu0 %v823, 127
    %v841 = vpop.permute.xlu0 %840
    %842 = vrot.lane.b32.xlu0 %v824, 127
    %v843 = vpop.permute.xlu0 %842
    %844 = vrot.lane.b32.xlu0 %v825, 127
    %v845 = vpop.permute.xlu0 %844
    %846 = vrot.lane.b32.xlu0 %v826, 127
    %v847 = vpop.permute.xlu0 %846
    %848 = vrot.lane.b32.xlu0 %v827, 127
    %v849 = vpop.permute.xlu0 %848
    %850 = vrot.lane.b32.xlu0 %v828, 127
    %v851 = vpop.permute.xlu0 %850
    %v852 = vsel %vm258, %v839, %v841
    %v853 = vsel %vm258, %v841, %v843
    %v854 = vsel %vm258, %v843, %v845
    %v855 = vsel %vm258, %v845, %v847
    %v856 = vsel %vm258, %v847, %v849
    %v857 = vsel %vm258, %v849, %v851
    %858 = vrot.lane.b32.xlu0 %v822, 126
    %v859 = vpop.permute.xlu0 %858
    %860 = vrot.lane.b32.xlu0 %v823, 126
    %v861 = vpop.permute.xlu0 %860
    %862 = vrot.lane.b32.xlu0 %v824, 126
    %v863 = vpop.permute.xlu0 %862
    %864 = vrot.lane.b32.xlu0 %v825, 126
    %v865 = vpop.permute.xlu0 %864
    %866 = vrot.lane.b32.xlu0 %v826, 126
    %v867 = vpop.permute.xlu0 %866
    %868 = vrot.lane.b32.xlu0 %v827, 126
    %v869 = vpop.permute.xlu0 %868
    %870 = vrot.lane.b32.xlu0 %v828, 126
    %v871 = vpop.permute.xlu0 %870
    %v872 = vsel %vm293, %v859, %v861
    %v873 = vsel %vm293, %v861, %v863
    %v874 = vsel %vm293, %v863, %v865
    %v875 = vsel %vm293, %v865, %v867
    %v876 = vsel %vm293, %v867, %v869
    %v877 = vsel %vm293, %v869, %v871
    %878 = vrot.lane.b32.xlu0 %v822, 110
    %v879 = vpop.permute.xlu0 %878
    %880 = vrot.lane.b32.xlu0 %v823, 110
    %v881 = vpop.permute.xlu0 %880
    %882 = vrot.lane.b32.xlu0 %v824, 110
    %v883 = vpop.permute.xlu0 %882
    %884 = vrot.lane.b32.xlu0 %v825, 110
    %v885 = vpop.permute.xlu0 %884
    %886 = vrot.lane.b32.xlu0 %v826, 110
    %v887 = vpop.permute.xlu0 %886
    %888 = vrot.lane.b32.xlu0 %v827, 110
    %v889 = vpop.permute.xlu0 %888
    %890 = vrot.lane.b32.xlu0 %v828, 110
    %v891 = vpop.permute.xlu0 %890
    %v892 = vsel %vm328, %v879, %v881
    %v893 = vsel %vm328, %v881, %v883
    %v894 = vsel %vm328, %v883, %v885
    %v895 = vsel %vm328, %v885, %v887
    %v896 = vsel %vm328, %v887, %v889
    %v897 = vsel %vm328, %v889, %v891
    %898 = vrot.lane.b32.xlu0 %v823, 109
    %v899 = vpop.permute.xlu0 %898
    %900 = vrot.lane.b32.xlu0 %v824, 109
    %v901 = vpop.permute.xlu0 %900
    %902 = vrot.lane.b32.xlu0 %v825, 109
    %v903 = vpop.permute.xlu0 %902
    %904 = vrot.lane.b32.xlu0 %v826, 109
    %v905 = vpop.permute.xlu0 %904
    %906 = vrot.lane.b32.xlu0 %v827, 109
    %v907 = vpop.permute.xlu0 %906
    %908 = vrot.lane.b32.xlu0 %v828, 109
    %v909 = vpop.permute.xlu0 %908
    %v910 = vsel %vm363, %v899, %v901
    %v911 = vsel %vm363, %v901, %v903
    %v912 = vsel %vm363, %v903, %v905
    %v913 = vsel %vm363, %v905, %v907
    %v914 = vsel %vm363, %v907, %v909
    %916 = vrot.lane.b32.xlu0 %v823, 108
    %v917 = vpop.permute.xlu0 %916
    %918 = vrot.lane.b32.xlu0 %v824, 108
    %v919 = vpop.permute.xlu0 %918
    %920 = vrot.lane.b32.xlu0 %v825, 108
    %v921 = vpop.permute.xlu0 %920
    %922 = vrot.lane.b32.xlu0 %v826, 108
    %v923 = vpop.permute.xlu0 %922
    %924 = vrot.lane.b32.xlu0 %v827, 108
    %v925 = vpop.permute.xlu0 %924
    %926 = vrot.lane.b32.xlu0 %v828, 108
    %v927 = vpop.permute.xlu0 %926
    %928 = vrot.lane.b32.xlu0 %v829, 108
    %v929 = vpop.permute.xlu0 %928
    %v930 = vsel %vm398, %v917, %v919
    %v931 = vsel %vm398, %v919, %v921
    %v932 = vsel %vm398, %v921, %v923
    %v933 = vsel %vm398, %v923, %v925
    %v934 = vsel %vm398, %v925, %v927
    %v935 = vsel %vm398, %v927, %v929
    %936 = vrot.lane.b32.xlu0 %v823, 92
    %v937 = vpop.permute.xlu0 %936
    %938 = vrot.lane.b32.xlu0 %v824, 92
    %v939 = vpop.permute.xlu0 %938
    %940 = vrot.lane.b32.xlu0 %v825, 92
    %v941 = vpop.permute.xlu0 %940
    %942 = vrot.lane.b32.xlu0 %v826, 92
    %v943 = vpop.permute.xlu0 %942
    %944 = vrot.lane.b32.xlu0 %v827, 92
    %v945 = vpop.permute.xlu0 %944
    %946 = vrot.lane.b32.xlu0 %v828, 92
    %v947 = vpop.permute.xlu0 %946
    %948 = vrot.lane.b32.xlu0 %v829, 92
    %v949 = vpop.permute.xlu0 %948
    %v950 = vsel %vm433, %v937, %v939
    %v951 = vsel %vm433, %v939, %v941
    %v952 = vsel %vm433, %v941, %v943
    %v953 = vsel %vm433, %v943, %v945
    %v954 = vsel %vm433, %v945, %v947
    %v955 = vsel %vm433, %v947, %v949
    %956 = vrot.lane.b32.xlu0 %v823, 91
    %v957 = vpop.permute.xlu0 %956
    %958 = vrot.lane.b32.xlu0 %v824, 91
    %v959 = vpop.permute.xlu0 %958
    %960 = vrot.lane.b32.xlu0 %v825, 91
    %v961 = vpop.permute.xlu0 %960
    %962 = vrot.lane.b32.xlu0 %v826, 91
    %v963 = vpop.permute.xlu0 %962
    %964 = vrot.lane.b32.xlu0 %v827, 91
    %v965 = vpop.permute.xlu0 %964
    %966 = vrot.lane.b32.xlu0 %v828, 91
    %v967 = vpop.permute.xlu0 %966
    %968 = vrot.lane.b32.xlu0 %v829, 91
    %v969 = vpop.permute.xlu0 %968
    %v970 = vsel %vm468, %v957, %v959
    %v971 = vsel %vm468, %v959, %v961
    %v972 = vsel %vm468, %v961, %v963
    %v973 = vsel %vm468, %v963, %v965
    %v974 = vsel %vm468, %v965, %v967
    %v975 = vsel %vm468, %v967, %v969
    %976 = vrot.lane.b32.xlu0 %v823, 90
    %v977 = vpop.permute.xlu0 %976
    %978 = vrot.lane.b32.xlu0 %v824, 90
    %v979 = vpop.permute.xlu0 %978
    %980 = vrot.lane.b32.xlu0 %v825, 90
    %v981 = vpop.permute.xlu0 %980
    %982 = vrot.lane.b32.xlu0 %v826, 90
    %v983 = vpop.permute.xlu0 %982
    %984 = vrot.lane.b32.xlu0 %v827, 90
    %v985 = vpop.permute.xlu0 %984
    %986 = vrot.lane.b32.xlu0 %v828, 90
    %v987 = vpop.permute.xlu0 %986
    %988 = vrot.lane.b32.xlu0 %v829, 90
    %v989 = vpop.permute.xlu0 %988
    %v990 = vsel %vm503, %v977, %v979
    %v991 = vsel %vm503, %v979, %v981
    %v992 = vsel %vm503, %v981, %v983
    %v993 = vsel %vm503, %v983, %v985
    %v994 = vsel %vm503, %v985, %v987
    %v995 = vsel %vm503, %v987, %v989
    %v996 = vld [vmem:[%s5] sm:$0xff]
    %998 = vset.pattern.permute.xlu0 0
    %999 = vperm.xlu0 %998, %v996
    %v1000 = vpop.permute.xlu0 %999
    %1002 = vrot.lane.b32.xlu0 %v822, 19
    %v1003 = vpop.permute.xlu0 %1002
    %1004 = vrot.lane.b32.xlu0 %v823, 19
    %v1005 = vpop.permute.xlu0 %1004
    %1006 = vrot.lane.b32.xlu0 %v824, 19
    %v1007 = vpop.permute.xlu0 %1006
    %1008 = vrot.lane.b32.xlu0 %v825, 19
    %v1009 = vpop.permute.xlu0 %1008
    %1010 = vrot.lane.b32.xlu0 %v826, 19
    %v1011 = vpop.permute.xlu0 %1010
    %1012 = vrot.lane.b32.xlu0 %v827, 19
    %v1013 = vpop.permute.xlu0 %1012
    %1014 = vrot.lane.b32.xlu0 %v828, 19
    %v1015 = vpop.permute.xlu0 %1014
    %1016 = vrot.lane.b32.xlu0 %v852, 19
    %v1017 = vpop.permute.xlu0 %1016
    %1018 = vrot.lane.b32.xlu0 %v853, 19
    %v1019 = vpop.permute.xlu0 %1018
    %1020 = vrot.lane.b32.xlu0 %v854, 19
    %v1021 = vpop.permute.xlu0 %1020
    %1022 = vrot.lane.b32.xlu0 %v855, 19
    %v1023 = vpop.permute.xlu0 %1022
    %1024 = vrot.lane.b32.xlu0 %v856, 19
    %v1025 = vpop.permute.xlu0 %1024
    %1026 = vrot.lane.b32.xlu0 %v857, 19
    %v1027 = vpop.permute.xlu0 %1026
    %1028 = vrot.lane.b32.xlu0 %v851, 19
    %v1029 = vpop.permute.xlu0 %1028
    %1030 = vrot.lane.b32.xlu0 %v872, 19
    %v1031 = vpop.permute.xlu0 %1030
    %1032 = vrot.lane.b32.xlu0 %v873, 19
    %v1033 = vpop.permute.xlu0 %1032
    %1034 = vrot.lane.b32.xlu0 %v874, 19
    %v1035 = vpop.permute.xlu0 %1034
    %1036 = vrot.lane.b32.xlu0 %v875, 19
    %v1037 = vpop.permute.xlu0 %1036
    %1038 = vrot.lane.b32.xlu0 %v876, 19
    %v1039 = vpop.permute.xlu0 %1038
    %1040 = vrot.lane.b32.xlu0 %v877, 19
    %v1041 = vpop.permute.xlu0 %1040
    %1042 = vrot.lane.b32.xlu0 %v871, 19
    %v1043 = vpop.permute.xlu0 %1042
    %1044 = vrot.lane.b32.xlu0 %v892, 19
    %v1045 = vpop.permute.xlu0 %1044
    %1046 = vrot.lane.b32.xlu0 %v893, 19
    %v1047 = vpop.permute.xlu0 %1046
    %1048 = vrot.lane.b32.xlu0 %v894, 19
    %v1049 = vpop.permute.xlu0 %1048
    %1050 = vrot.lane.b32.xlu0 %v895, 19
    %v1051 = vpop.permute.xlu0 %1050
    %1052 = vrot.lane.b32.xlu0 %v896, 19
    %v1053 = vpop.permute.xlu0 %1052
    %1054 = vrot.lane.b32.xlu0 %v897, 19
    %v1055 = vpop.permute.xlu0 %1054
    %1056 = vrot.lane.b32.xlu0 %v891, 19
    %v1057 = vpop.permute.xlu0 %1056
    %1058 = vrot.lane.b32.xlu0 %v899, 19
    %v1059 = vpop.permute.xlu0 %1058
    %1060 = vrot.lane.b32.xlu0 %v910, 19
    %v1061 = vpop.permute.xlu0 %1060
    %1062 = vrot.lane.b32.xlu0 %v911, 19
    %v1063 = vpop.permute.xlu0 %1062
    %1064 = vrot.lane.b32.xlu0 %v912, 19
    %v1065 = vpop.permute.xlu0 %1064
    %1066 = vrot.lane.b32.xlu0 %v913, 19
    %v1067 = vpop.permute.xlu0 %1066
    %1068 = vrot.lane.b32.xlu0 %v914, 19
    %v1069 = vpop.permute.xlu0 %1068
    %1070 = vrot.lane.b32.xlu0 %v909, 19
    %v1071 = vpop.permute.xlu0 %1070
    %1072 = vrot.lane.b32.xlu0 %v917, 19
    %v1073 = vpop.permute.xlu0 %1072
    %1074 = vrot.lane.b32.xlu0 %v930, 19
    %v1075 = vpop.permute.xlu0 %1074
    %1076 = vrot.lane.b32.xlu0 %v931, 19
    %v1077 = vpop.permute.xlu0 %1076
    %1078 = vrot.lane.b32.xlu0 %v932, 19
    %v1079 = vpop.permute.xlu0 %1078
    %1080 = vrot.lane.b32.xlu0 %v933, 19
    %v1081 = vpop.permute.xlu0 %1080
    %1082 = vrot.lane.b32.xlu0 %v934, 19
    %v1083 = vpop.permute.xlu0 %1082
    %1084 = vrot.lane.b32.xlu0 %v935, 19
    %v1085 = vpop.permute.xlu0 %1084
    %1086 = vrot.lane.b32.xlu0 %v937, 19
    %v1087 = vpop.permute.xlu0 %1086
    %1088 = vrot.lane.b32.xlu0 %v950, 19
    %v1089 = vpop.permute.xlu0 %1088
    %1090 = vrot.lane.b32.xlu0 %v951, 19
    %v1091 = vpop.permute.xlu0 %1090
    %1092 = vrot.lane.b32.xlu0 %v952, 19
    %v1093 = vpop.permute.xlu0 %1092
    %1094 = vrot.lane.b32.xlu0 %v953, 19
    %v1095 = vpop.permute.xlu0 %1094
    %1096 = vrot.lane.b32.xlu0 %v954, 19
    %v1097 = vpop.permute.xlu0 %1096
    %1098 = vrot.lane.b32.xlu0 %v955, 19
    %v1099 = vpop.permute.xlu0 %1098
    %1100 = vrot.lane.b32.xlu0 %v957, 19
    %v1101 = vpop.permute.xlu0 %1100
    %1102 = vrot.lane.b32.xlu0 %v970, 19
    %v1103 = vpop.permute.xlu0 %1102
    %1104 = vrot.lane.b32.xlu0 %v971, 19
    %v1105 = vpop.permute.xlu0 %1104
    %1106 = vrot.lane.b32.xlu0 %v972, 19
    %v1107 = vpop.permute.xlu0 %1106
    %1108 = vrot.lane.b32.xlu0 %v973, 19
    %v1109 = vpop.permute.xlu0 %1108
    %1110 = vrot.lane.b32.xlu0 %v974, 19
    %v1111 = vpop.permute.xlu0 %1110
    %1112 = vrot.lane.b32.xlu0 %v975, 19
    %v1113 = vpop.permute.xlu0 %1112
    %1114 = vrot.lane.b32.xlu0 %v977, 19
    %v1115 = vpop.permute.xlu0 %1114
    %1116 = vrot.lane.b32.xlu0 %v990, 19
    %v1117 = vpop.permute.xlu0 %1116
    %1118 = vrot.lane.b32.xlu0 %v991, 19
    %v1119 = vpop.permute.xlu0 %1118
    %1120 = vrot.lane.b32.xlu0 %v992, 19
    %v1121 = vpop.permute.xlu0 %1120
    %1122 = vrot.lane.b32.xlu0 %v993, 19
    %v1123 = vpop.permute.xlu0 %1122
    %1124 = vrot.lane.b32.xlu0 %v994, 19
    %v1125 = vpop.permute.xlu0 %1124
    %1126 = vrot.lane.b32.xlu0 %v995, 19
    %v1127 = vpop.permute.xlu0 %1126
    %vm1128 = vcmask 154624
    %v1129 = vsel %vm1128, %v1003, %v1005
    %v1130 = vsel %vm1128, %v1005, %v1007
    %v1131 = vsel %vm1128, %v1007, %v1009
    %v1132 = vsel %vm1128, %v1009, %v1011
    %v1133 = vsel %vm1128, %v1011, %v1013
    %v1134 = vsel %vm1128, %v1013, %v1015
    %v1135 = vsel %vm1128, %v1017, %v1019
    %v1136 = vsel %vm1128, %v1019, %v1021
    %v1137 = vsel %vm1128, %v1021, %v1023
    %v1138 = vsel %vm1128, %v1023, %v1025
    %v1139 = vsel %vm1128, %v1025, %v1027
    %v1140 = vsel %vm1128, %v1027, %v1029
    %v1141 = vsel %vm1128, %v1031, %v1033
    %v1142 = vsel %vm1128, %v1033, %v1035
    %v1143 = vsel %vm1128, %v1035, %v1037
    %v1144 = vsel %vm1128, %v1037, %v1039
    %v1145 = vsel %vm1128, %v1039, %v1041
    %v1146 = vsel %vm1128, %v1041, %v1043
    %v1147 = vsel %vm1128, %v1045, %v1047
    %v1148 = vsel %vm1128, %v1047, %v1049
    %v1149 = vsel %vm1128, %v1049, %v1051
    %v1150 = vsel %vm1128, %v1051, %v1053
    %v1151 = vsel %vm1128, %v1053, %v1055
    %v1152 = vsel %vm1128, %v1055, %v1057
    %v1153 = vsel %vm1128, %v1059, %v1061
    %v1154 = vsel %vm1128, %v1061, %v1063
    %v1155 = vsel %vm1128, %v1063, %v1065
    %v1156 = vsel %vm1128, %v1065, %v1067
    %v1157 = vsel %vm1128, %v1067, %v1069
    %v1158 = vsel %vm1128, %v1069, %v1071
    %v1159 = vsel %vm1128, %v1073, %v1075
    %v1160 = vsel %vm1128, %v1075, %v1077
    %v1161 = vsel %vm1128, %v1077, %v1079
    %v1162 = vsel %vm1128, %v1079, %v1081
    %v1163 = vsel %vm1128, %v1081, %v1083
    %v1164 = vsel %vm1128, %v1083, %v1085
    %v1165 = vsel %vm1128, %v1087, %v1089
    %v1166 = vsel %vm1128, %v1089, %v1091
    %v1167 = vsel %vm1128, %v1091, %v1093
    %v1168 = vsel %vm1128, %v1093, %v1095
    %v1169 = vsel %vm1128, %v1095, %v1097
    %v1170 = vsel %vm1128, %v1097, %v1099
    %v1171 = vsel %vm1128, %v1101, %v1103
    %v1172 = vsel %vm1128, %v1103, %v1105
    %v1173 = vsel %vm1128, %v1105, %v1107
    %v1174 = vsel %vm1128, %v1107, %v1109
    %v1175 = vsel %vm1128, %v1109, %v1111
    %v1176 = vsel %vm1128, %v1111, %v1113
    %v1177 = vsel %vm1128, %v1115, %v1117
    %v1178 = vsel %vm1128, %v1117, %v1119
    %v1179 = vsel %vm1128, %v1119, %v1121
    %v1180 = vsel %vm1128, %v1121, %v1123
    %v1181 = vsel %vm1128, %v1123, %v1125
    %v1182 = vsel %vm1128, %v1125, %v1127
    %v1238 = vsel %vm526, %v830, 0
    %1240 = vmatprep.subr.mxu0 0.0
    %1241 = vmatpush1.msra.mxu0 0.0
    %1242 = vmatprep.subr.mxu0 0.0
    %1243 = vmatpush1.msra.mxu0 0.0
    %1244 = vmatprep.subr.mxu0 0.0
    %1245 = vmatpush1.msra.mxu0 0.0
    %1246 = vmatprep.subr.mxu0 0.0
    %1247 = vmatpush1.msra.mxu0 0.0
    %1248 = vmatprep.subr.mxu0 0.0
    %1249 = vmatpush1.msra.mxu0 0.0
    %1250 = vmatprep.subr.mxu0 0.0
    %1251 = vmatpush1.msra.mxu0 0.0
    %1252 = vmatprep.subr.mxu0 0.0
    %1253 = vmatpush1.msra.mxu0 0.0
    %1254 = vmatprep.subr.mxu0 %v1178
    %1255 = vmatpush1.msra.mxu0 %v1177
    %1256 = vmatprep.subr.mxu0 %v1172
    %1257 = vmatpush1.msra.mxu0 %v1171
    %1258 = vmatprep.subr.mxu0 %v1166
    %1259 = vmatpush1.msra.mxu0 %v1165
    %1260 = vmatprep.subr.mxu0 %v1160
    %1261 = vmatpush1.msra.mxu0 %v1159
    %1262 = vmatprep.subr.mxu0 %v1154
    %1263 = vmatpush1.msra.mxu0 %v1153
    %1264 = vmatprep.subr.mxu0 %v1148
    %1265 = vmatpush1.msra.mxu0 %v1147
    %1266 = vmatprep.subr.mxu0 %v1142
    %1267 = vmatpush1.msra.mxu0 %v1141
    %1268 = vmatprep.subr.mxu0 %v1136
    %1269 = vmatpush1.msra.mxu0 %v1135
    %1270 = vmatprep.subr.mxu0 %v1130
    %1271 = vmatpush1.msra.mxu0 %v1129
    %1272 = vmatprep.subr.mxu0 0.0
    %1273 = vmatpush2.msra.mxu0 0.0
    %1274 = vmatprep.subr.mxu0 0.0
    %1275 = vmatpush2.msra.mxu0 0.0
    %1276 = vmatprep.subr.mxu0 0.0
    %1277 = vmatpush2.msra.mxu0 0.0
    %1278 = vmatprep.subr.mxu0 0.0
    %1279 = vmatpush2.msra.mxu0 0.0
    %1280 = vmatprep.subr.mxu0 0.0
    %1281 = vmatpush2.msra.mxu0 0.0
    %1282 = vmatprep.subr.mxu0 0.0
    %1283 = vmatpush2.msra.mxu0 0.0
    %1284 = vmatprep.subr.mxu0 0.0
    %1285 = vmatpush2.msra.mxu0 0.0
    %1286 = vmatprep.subr.mxu0 0.0
    %1287 = vmatpush2.msra.mxu0 0.0
    %1288 = vmatprep.subr.mxu0 0.0
    %1289 = vmatpush2.msra.mxu0 0.0
    %1290 = vmatprep.subr.mxu0 0.0
    %1291 = vmatpush2.msra.mxu0 0.0
    %1292 = vmatprep.subr.mxu0 0.0
    %1293 = vmatpush2.msra.mxu0 0.0
    %1294 = vmatprep.subr.mxu0 0.0
    %1295 = vmatpush2.msra.mxu0 0.0
    %1296 = vmatprep.subr.mxu0 0.0
    %1297 = vmatpush2.msra.mxu0 0.0
    %1298 = vmatprep.subr.mxu0 0.0
    %1299 = vmatpush2.msra.mxu0 0.0
    %1300 = vmatprep.subr.mxu0 0.0
    %1301 = vmatpush2.msra.mxu0 0.0
    %1302 = vmatprep.subr.mxu0 0.0
    %1303 = vmatpush2.msra.mxu0 0.0
    %1304 = vmatprep.mubr.f32.mxu0 0.0
    %1305 = vmatmul.mubr.f32.gmra.mxu0 %v1238
    %v1306 = vpop.f32.mrf.mxu0
    %v1307 = vadd.f32 %v1000, %v1306
    %v1308 = vpop.f32.mrf.mxu0
    %v1309 = vadd.f32 %v1000, %v1308
    %1310 = vdwg.mxu0
    %1311 = vmatprep.subr.mxu0 0.0
    %1312 = vmatpush1.msra.mxu0 0.0
    %1313 = vmatprep.subr.mxu0 0.0
    %1314 = vmatpush1.msra.mxu0 0.0
    %1315 = vmatprep.subr.mxu0 0.0
    %1316 = vmatpush1.msra.mxu0 0.0
    %1317 = vmatprep.subr.mxu0 0.0
    %1318 = vmatpush1.msra.mxu0 0.0
    %1319 = vmatprep.subr.mxu0 0.0
    %1320 = vmatpush1.msra.mxu0 0.0
    %1321 = vmatprep.subr.mxu0 0.0
    %1322 = vmatpush1.msra.mxu0 0.0
    %1323 = vmatprep.subr.mxu0 0.0
    %1324 = vmatpush1.msra.mxu0 0.0
    %1325 = vmatprep.subr.mxu0 %v1180
    %1326 = vmatpush1.msra.mxu0 %v1179
    %1327 = vmatprep.subr.mxu0 %v1174
    %1328 = vmatpush1.msra.mxu0 %v1173
    %1329 = vmatprep.subr.mxu0 %v1168
    %1330 = vmatpush1.msra.mxu0 %v1167
    %1331 = vmatprep.subr.mxu0 %v1162
    %1332 = vmatpush1.msra.mxu0 %v1161
    %1333 = vmatprep.subr.mxu0 %v1156
    %1334 = vmatpush1.msra.mxu0 %v1155
    %1335 = vmatprep.subr.mxu0 %v1150
    %1336 = vmatpush1.msra.mxu0 %v1149
    %1337 = vmatprep.subr.mxu0 %v1144
    %1338 = vmatpush1.msra.mxu0 %v1143
    %1339 = vmatprep.subr.mxu0 %v1138
    %1340 = vmatpush1.msra.mxu0 %v1137
    %1341 = vmatprep.subr.mxu0 %v1132
    %1342 = vmatpush1.msra.mxu0 %v1131
    %1343 = vmatprep.subr.mxu0 0.0
    %1344 = vmatpush2.msra.mxu0 0.0
    %1345 = vmatprep.subr.mxu0 0.0
    %1346 = vmatpush2.msra.mxu0 0.0
    %1347 = vmatprep.subr.mxu0 0.0
    %1348 = vmatpush2.msra.mxu0 0.0
    %1349 = vmatprep.subr.mxu0 0.0
    %1350 = vmatpush2.msra.mxu0 0.0
    %1351 = vmatprep.subr.mxu0 0.0
    %1352 = vmatpush2.msra.mxu0 0.0
    %1353 = vmatprep.subr.mxu0 0.0
    %1354 = vmatpush2.msra.mxu0 0.0
    %1355 = vmatprep.subr.mxu0 0.0
    %1356 = vmatpush2.msra.mxu0 0.0
    %1357 = vmatprep.subr.mxu0 0.0
    %1358 = vmatpush2.msra.mxu0 0.0
    %1359 = vmatprep.subr.mxu0 0.0
    %1360 = vmatpush2.msra.mxu0 0.0
    %1361 = vmatprep.subr.mxu0 0.0
    %1362 = vmatpush2.msra.mxu0 0.0
    %1363 = vmatprep.subr.mxu0 0.0
    %1364 = vmatpush2.msra.mxu0 0.0
    %1365 = vmatprep.subr.mxu0 0.0
    %1366 = vmatpush2.msra.mxu0 0.0
    %1367 = vmatprep.subr.mxu0 0.0
    %1368 = vmatpush2.msra.mxu0 0.0
    %1369 = vmatprep.subr.mxu0 0.0
    %1370 = vmatpush2.msra.mxu0 0.0
    %1371 = vmatprep.subr.mxu0 0.0
    %1372 = vmatpush2.msra.mxu0 0.0
    %1373 = vmatprep.subr.mxu0 0.0
    %1374 = vmatpush2.msra.mxu0 0.0
    %1375 = vmatprep.mubr.f32.mxu0 0.0
    %1376 = vmatmul.mubr.f32.gmra.mxu0 %v1238
    %v1377 = vpop.f32.mrf.mxu0
    %v1378 = vadd.f32 %v1000, %v1377
    %v1379 = vpop.f32.mrf.mxu0
    %v1380 = vadd.f32 %v1000, %v1379
    %1381 = vdwg.mxu0
    %1382 = vmatprep.subr.mxu0 0.0
    %1383 = vmatpush1.msra.mxu0 0.0
    %1384 = vmatprep.subr.mxu0 0.0
    %1385 = vmatpush1.msra.mxu0 0.0
    %1386 = vmatprep.subr.mxu0 0.0
    %1387 = vmatpush1.msra.mxu0 0.0
    %1388 = vmatprep.subr.mxu0 0.0
    %1389 = vmatpush1.msra.mxu0 0.0
    %1390 = vmatprep.subr.mxu0 0.0
    %1391 = vmatpush1.msra.mxu0 0.0
    %1392 = vmatprep.subr.mxu0 0.0
    %1393 = vmatpush1.msra.mxu0 0.0
    %1394 = vmatprep.subr.mxu0 0.0
    %1395 = vmatpush1.msra.mxu0 0.0
    %1396 = vmatprep.subr.mxu0 %v1182
    %1397 = vmatpush1.msra.mxu0 %v1181
    %1398 = vmatprep.subr.mxu0 %v1176
    %1399 = vmatpush1.msra.mxu0 %v1175
    %1400 = vmatprep.subr.mxu0 %v1170
    %1401 = vmatpush1.msra.mxu0 %v1169
    %1402 = vmatprep.subr.mxu0 %v1164
    %1403 = vmatpush1.msra.mxu0 %v1163
    %1404 = vmatprep.subr.mxu0 %v1158
    %1405 = vmatpush1.msra.mxu0 %v1157
    %1406 = vmatprep.subr.mxu0 %v1152
    %1407 = vmatpush1.msra.mxu0 %v1151
    %1408 = vmatprep.subr.mxu0 %v1146
    %1409 = vmatpush1.msra.mxu0 %v1145
    %1410 = vmatprep.subr.mxu0 %v1140
    %1411 = vmatpush1.msra.mxu0 %v1139
    %1412 = vmatprep.subr.mxu0 %v1134
    %1413 = vmatpush1.msra.mxu0 %v1133
    %1414 = vmatprep.subr.mxu0 0.0
    %1415 = vmatpush2.msra.mxu0 0.0
    %1416 = vmatprep.subr.mxu0 0.0
    %1417 = vmatpush2.msra.mxu0 0.0
    %1418 = vmatprep.subr.mxu0 0.0
    %1419 = vmatpush2.msra.mxu0 0.0
    %1420 = vmatprep.subr.mxu0 0.0
    %1421 = vmatpush2.msra.mxu0 0.0
    %1422 = vmatprep.subr.mxu0 0.0
    %1423 = vmatpush2.msra.mxu0 0.0
    %1424 = vmatprep.subr.mxu0 0.0
    %1425 = vmatpush2.msra.mxu0 0.0
    %1426 = vmatprep.subr.mxu0 0.0
    %1427 = vmatpush2.msra.mxu0 0.0
    %1428 = vmatprep.subr.mxu0 0.0
    %1429 = vmatpush2.msra.mxu0 0.0
    %1430 = vmatprep.subr.mxu0 0.0
    %1431 = vmatpush2.msra.mxu0 0.0
    %1432 = vmatprep.subr.mxu0 0.0
    %1433 = vmatpush2.msra.mxu0 0.0
    %1434 = vmatprep.subr.mxu0 0.0
    %1435 = vmatpush2.msra.mxu0 0.0
    %1436 = vmatprep.subr.mxu0 0.0
    %1437 = vmatpush2.msra.mxu0 0.0
    %1438 = vmatprep.subr.mxu0 0.0
    %1439 = vmatpush2.msra.mxu0 0.0
    %1440 = vmatprep.subr.mxu0 0.0
    %1441 = vmatpush2.msra.mxu0 0.0
    %1442 = vmatprep.subr.mxu0 0.0
    %1443 = vmatpush2.msra.mxu0 0.0
    %1444 = vmatprep.subr.mxu0 0.0
    %1445 = vmatpush2.msra.mxu0 0.0
    %1446 = vmatprep.mubr.f32.mxu0 0.0
    %1447 = vmatmul.mubr.f32.gmra.mxu0 %v1238
    %v1448 = vpop.f32.mrf.mxu0
    %v1449 = vadd.f32 %v1000, %v1448
    %v1450 = vpop.f32.mrf.mxu0
    %v1451 = vadd.f32 %v1000, %v1450
    %1452 = vdwg.mxu0
    %v1453 = vld [vmem:[#allocation5] sm:$0xff]
    %v1454 = vld [vmem:[#allocation5 + $0x8] sm:$0xff]
    %v1455 = vld [vmem:[#allocation5 + $0x10] sm:$0xff]
    %v1456 = vadd.f32 %v1307, %v1453
    %v1457 = vadd.f32 %v1309, %v1454
    %v1458 = vadd.f32 %v1378, %v1455
    %v1459 = vmax.f32 %v1456, 0.0
    %v1460 = vmax.f32 %v1457, 0.0
    %v1461 = vmax.f32 %v1458, 0.0
    %1462 = vst [vmem:[#allocation7] sm:$0xff] %v1459
    %1463 = vst [vmem:[#allocation7 + $0x8] sm:$0xff] %v1460
    %1464 = vst [vmem:[#allocation7 + $0x10] sm:$0xff] %v1461
    %s1465 = scalar_lea.vmem [#allocation5], 24
    %v1466 = vld [vmem:[%s1465] sm:$0xff]
    %v1467 = vld [vmem:[%s1465 + $0x8] sm:$0xff]
    %v1468 = vld [vmem:[%s1465 + $0x10] sm:$0xff]
    %v1469 = vadd.f32 %v1380, %v1466
    %v1470 = vadd.f32 %v1449, %v1467
    %v1471 = vadd.f32 %v1451, %v1468
    %v1472 = vmax.f32 %v1469, 0.0
    %v1473 = vmax.f32 %v1470, 0.0
    %v1474 = vmax.f32 %v1471, 0.0
    %s1475 = scalar_lea.vmem [#allocation7], 24
    %1476 = vst [vmem:[%s1475] sm:$0xff] %v1472
    %1477 = vst [vmem:[%s1475 + $0x8] sm:$0xff] %v1473
    %1478 = vst [vmem:[%s1475 + $0x10] sm:$0xff] %v1474
    // Predicated region
    $region34: #{tpu_custom_call.1} parent=1 // pred_check
      _
    $region35: #{tpu_custom_call.1} parent=1 // pred_check_branch
      %1480 = sbr.rel (0) target = $region37
    $region36: #{tpu_custom_call.1} parent=1 // pred_region
      %s1482 = ssub.s32 768, 768
      %1483 = vsyncadd [#allocation4], %s1482
      %s1484 = sshll.u32 [#allocation7], 4
      %s1485 = int_to_ptr.vmem [resolvable:$true] %s1484
      %1490 = dma.vmem_to_hbm [thread:$0]  %s1485, 768, %s6, [#allocation4], 384, 384, 24
    $region37: #{tpu_custom_call.1} parent=1 // pred_fallthru
      _
    // Predicated region
    $region38: #{tpu_custom_call.1} parent=1 // pred_check
      _
    $region39: #{tpu_custom_call.1} parent=1 // pred_check_branch
      %1492 = sbr.rel (0) target = $region41
    $region40: #{tpu_custom_call.1} parent=1 // pred_region
      %1493 = dma.done [#allocation4], 768
    $region41: #{tpu_custom_call.1} parent=1 // pred_fallthru
      _
    %1494 = vsyncpa [#allocation3], 1
    %1495 = vsyncpa [#allocation6], 1
    %1496 = vsyncpa [#allocation4], 1

</llo_original>
